<compile_context>
chip_gen: v7x
topology: tpu7x:2x2x1
jax: 0.10.0
libtpu: 0.0.40
codegen_flags: <defaults>
</compile_context>

<pallas_src>
import functools

import jax
import jax.numpy as jnp
from jax import lax
from jax.experimental import pallas as pl
from jax.experimental.pallas import tpu as pltpu


_LANE = 128     # per-gate column padding and the lane offset where state lives
_SUBLANE = 8    # f32 sublane packing: batch-tile granularity


def _round_up(n, m):
    return ((n + m - 1) // m) * m


# --------------------------------------------------------------------------- #
# Kernel
# --------------------------------------------------------------------------- #
def _gru_cell_kernel(xh_ref, w_ref, out_ref, *, dp, hp):
    """One fused GRUCell step on a (bB, Dp+Hp) batch tile.

    xh_ref : (bB, Dp+Hp)   packed [x | 1 | 0 | h | 0] activations (streamed)
    w_ref  : (Dp+Hp, 4*Hp) packed weights with biases folded in (resident)
    out_ref: (bB, Hp)      lane-dense output slab; wrapper slices [:, :H]
    """
    xh = xh_ref[...]

    # Single MXU pass: one K tile (Dp+Hp rows) x 4 lane-aligned gate blocks.
    # Column blocks of g: [i_r+h_r+b_r | i_z+h_z+b_z | i_n+b_in | h_n+b_hn].
    g = jnp.dot(xh, w_ref[...],
                precision=lax.Precision.HIGHEST,
                preferred_element_type=jnp.float32)

    r = jax.nn.sigmoid(g[:, 0:hp])
    z = jax.nn.sigmoid(g[:, hp:2 * hp])
    n = jnp.tanh(g[:, 2 * hp:3 * hp] + r * g[:, 3 * hp:4 * hp])

    # Previous hidden state: already zero-padded to Hp lanes at a vreg-aligned
    # offset inside the packed input, so no in-kernel pad/concat is needed.
    h_prev = xh[:, dp:dp + hp].astype(jnp.float32)

    # Full-lane (unmasked) store; padded lanes hold don't-care values that the
    # wrapper slices off.
    out_ref[...] = ((1.0 - z) * n + z * h_prev).astype(out_ref.dtype)


# --------------------------------------------------------------------------- #
# Parameter packing (done once, outside the kernel)
# --------------------------------------------------------------------------- #
def pack_gru_params(w_ih, w_hh, b_ih, b_hh):
    """Pack GRUCell params into one lane-aligned (Dp+Hp, 4*Hp) matrix.

    w_ih: (Din, 3H) (already transposed), w_hh: (H, 3H), b_ih/b_hh: (3H,).
    Row layout:    [0, Din)  x rows | row Din = bias row (ones lane)
                   [Dp, Dp+H) h rows | everything else zero.
    Column blocks: [r | z | i_n | h_n], each padded to 128 lanes.
    """
    din = w_ih.shape[0]
    h = w_hh.shape[0]
    assert w_ih.shape == (din, 3 * h)
    assert w_hh.shape == (h, 3 * h)
    b_ih = jnp.reshape(b_ih, (3 * h,))
    b_hh = jnp.reshape(b_hh, (3 * h,))

    hp = _round_up(h, _LANE)
    dp = _round_up(din + 1, _LANE)   # +1 for the folded-bias ones lane

    w = jnp.zeros((dp + hp, 4 * hp), jnp.float32)
    # x rows -> r / z / i_n gate blocks.
    w = w.at[:din, 0 * hp:0 * hp + h].set(w_ih[:, 0 * h:1 * h])
    w = w.at[:din, 1 * hp:1 * hp + h].set(w_ih[:, 1 * h:2 * h])
    w = w.at[:din, 2 * hp:2 * hp + h].set(w_ih[:, 2 * h:3 * h])
    # bias row (multiplied by the ones lane of the packed input).
    w = w.at[din, 0 * hp:0 * hp + h].set(b_ih[0 * h:1 * h] + b_hh[0 * h:1 * h])
    w = w.at[din, 1 * hp:1 * hp + h].set(b_ih[1 * h:2 * h] + b_hh[1 * h:2 * h])
    w = w.at[din, 2 * hp:2 * hp + h].set(b_ih[2 * h:3 * h])
    w = w.at[din, 3 * hp:3 * hp + h].set(b_hh[2 * h:3 * h])
    # h rows -> r / z / h_n gate blocks.
    w = w.at[dp:dp + h, 0 * hp:0 * hp + h].set(w_hh[:, 0 * h:1 * h])
    w = w.at[dp:dp + h, 1 * hp:1 * hp + h].set(w_hh[:, 1 * h:2 * h])
    w = w.at[dp:dp + h, 3 * hp:3 * hp + h].set(w_hh[:, 2 * h:3 * h])
    return w, din, h, dp, hp


# --------------------------------------------------------------------------- #
# Wrapper
# --------------------------------------------------------------------------- #
def _choose_batch_tile(b, block_b):
    """Batch tile: multiple of 8, minimal padding, and >=2 grid blocks when the
    batch is big enough so the "parallel" axis can shard across both v7x TCs."""
    nblk = pl.cdiv(b, block_b)
    if b >= 2 * _SUBLANE:
        nblk = max(nblk, 2)
    return _round_up(pl.cdiv(b, nblk), _SUBLANE)


def state_model_forward(state, obs, action, reward, next_obs, packed,
                        *, block_b=2048, matmul_dtype=jnp.float32):
    """StateModel.forward: x = cat([obs, action, reward, next_obs]); GRUCell(x, state)."""
    w, din, h, dp, hp = packed
    b = state.shape[0]
    assert obs.shape[1] + action.shape[1] + reward.shape[1] + next_obs.shape[1] == din
    assert state.shape[1] == h

    # Packed, lane-aligned activation slab:
    #   lanes [0, din)      : x = [obs | action | reward | next_obs]
    #   lane  din           : 1.0  (folds both biases into the matmul)
    #   lanes (din, dp)     : 0
    #   lanes [dp, dp+h)    : state (vreg-aligned so the kernel reuses it)
    #   lanes [dp+h, dp+hp) : 0
    f32 = jnp.float32
    xh = jnp.concatenate(
        [obs.astype(f32), action.astype(f32), reward.astype(f32),
         next_obs.astype(f32),
         jnp.ones((b, 1), f32),
         jnp.zeros((b, dp - din - 1), f32),
         state.astype(f32),
         jnp.zeros((b, hp - h), f32)],
        axis=1)
    if matmul_dtype != jnp.float32:
        # bf16 streaming halves input DMA bytes; MXU still accumulates in f32
        # and gate math stays f32.  (Weights cast once here, never in-kernel.)
        xh = xh.astype(matmul_dtype)
        w = w.astype(matmul_dtype)

    bb = _choose_batch_tile(b, block_b)
    grid = (pl.cdiv(b, bb),)           # partial edge block instead of jnp.pad
    kdim = dp + hp

    kernel = functools.partial(_gru_cell_kernel, dp=dp, hp=hp)

    cost = pl.CostEstimate(
        flops=2 * b * kdim * 4 * hp + 12 * b * hp,
        transcendentals=3 * b * hp,
        bytes_accessed=xh.dtype.itemsize * (b * kdim + kdim * 4 * hp) + 4 * b * hp,
    )

    out = pl.pallas_call(
        kernel,
        out_shape=jax.ShapeDtypeStruct((b, hp), jnp.float32),
        grid=grid,
        in_specs=[
            # Activations stream over the batch grid.
            pl.BlockSpec((bb, kdim), lambda i: (i, 0)),
            # Packed weights stay resident (constant block index) in VMEM.
            # TODO(synk): pipeline_mode=pl.Buffered(1) would drop the unused
            # second weight buffer; left at the default for compatibility.
            pl.BlockSpec((kdim, 4 * hp), lambda i: (0, 0)),
        ],
        out_specs=pl.BlockSpec((bb, hp), lambda i: (i, 0)),
        compiler_params=pltpu.CompilerParams(
            dimension_semantics=("parallel",),
            # Under jit, let XLA fuse the concat/pad producer into the kernel
            # operand instead of materializing the packed slab in HBM.
            allow_input_fusion=[True, False],
            vmem_limit_bytes=48 * 1024 * 1024,
        ),
        cost_estimate=cost,
    )(xh, w)

    # Slice the lane-dense slab back to the logical hidden width.
    return out[:, :h]


# --------------------------------------------------------------------------- #
# Pure-JAX reference and PyTorch-style init (for the correctness check)
# --------------------------------------------------------------------------- #
def state_model_forward_ref(state, obs, action, reward, next_obs, params):
    w_ih, w_hh, b_ih, b_hh = params
    x = jnp.concatenate([obs, action, reward, next_obs], axis=1)
    hsz = state.shape[1]
    hi = lax.Precision.HIGHEST
    gi = jnp.dot(x, w_ih, precision=hi) + b_ih
    gh = jnp.dot(state, w_hh, precision=hi) + b_hh
    r = jax.nn.sigmoid(gi[:, :hsz] + gh[:, :hsz])
    z = jax.nn.sigmoid(gi[:, hsz:2 * hsz] + gh[:, hsz:2 * hsz])
    n = jnp.tanh(gi[:, 2 * hsz:] + r * gh[:, 2 * hsz:])
    return (1.0 - z) * n + z * state


def init_params(key, din, hidden):
    """PyTorch GRUCell init: U(-1/sqrt(H), 1/sqrt(H)); weights transposed to (in, 3H)."""
    bound = 1.0 / (hidden ** 0.5)
    k1, k2, k3, k4 = jax.random.split(key, 4)
    w_ih = jax.random.uniform(k1, (din, 3 * hidden), jnp.float32, -bound, bound)
    w_hh = jax.random.uniform(k2, (hidden, 3 * hidden), jnp.float32, -bound, bound)
    b_ih = jax.random.uniform(k3, (3 * hidden,), jnp.float32, -bound, bound)
    b_hh = jax.random.uniform(k4, (3 * hidden,), jnp.float32, -bound, bound)
    return w_ih, w_hh, b_ih, b_hh


if __name__ == "__main__":
    # Small shapes consistent with the module:
    #   obs/next_obs: (B, obs_dim), action: (B, act_dim), reward: (B, 1),
    #   state: (B, state_dim); GRU input dim = 2*obs_dim + act_dim + 1.
    B = 8
    obs_dim = 17
    act_dim = 6
    state_dim = 32
    din = 2 * obs_dim + act_dim + 1

    key = jax.random.PRNGKey(0)
    ks = jax.random.split(key, 6)
    obs = jax.random.normal(ks[0], (B, obs_dim), jnp.float32)
    next_obs = jax.random.normal(ks[1], (B, obs_dim), jnp.float32)
    action = jax.random.normal(ks[2], (B, act_dim), jnp.float32)
    reward = jax.random.normal(ks[3], (B, 1), jnp.float32)
    state = jax.random.normal(ks[4], (B, state_dim), jnp.float32)
    params = init_params(ks[5], din, state_dim)
    packed = pack_gru_params(*params)

    h_new = state_model_forward(state, obs, action, reward, next_obs, packed)
    h_new = jax.block_until_ready(h_new)

    h_ref = state_model_forward_ref(state, obs, action, reward, next_obs, params)
    assert h_new.shape == (B, state_dim)
    assert jnp.allclose(h_new, h_ref, atol=1e-5, rtol=1e-5)

    print("KERNEL_OK")
</pallas_src>

<mosaic_0001>
module attributes {stable_mosaic.version = 11 : i64} {
  func.func @_gru_cell_kernel(%arg0: i32, %arg1: memref<8x256xf32, #tpu.memory_space<vmem>>, %arg2: memref<256x512xf32, #tpu.memory_space<vmem>>, %arg3: memref<8x128xf32, #tpu.memory_space<vmem>>) attributes {dimension_semantics = [#tpu.dimension_semantics<parallel>], iteration_bounds = array<i64: 1>, scalar_prefetch = 0 : i64, scratch_operands = 0 : i64, tpu.core_type = #tpu.core_type<tc>, window_params = [{transform_indices = @transform_0, window_bounds = array<i64: 8, 256>}, {pipeline_mode = #tpu.pipeline_mode<synchronous>, transform_indices = @transform_1, window_bounds = array<i64: 256, 512>}, {transform_indices = @transform_2, window_bounds = array<i64: 8, 128>}]} {
    %c0 = arith.constant 0 : index
    %c0_0 = arith.constant 0 : index
    %0 = vector.load %arg1[%c0, %c0_0] : memref<8x256xf32, #tpu.memory_space<vmem>>, vector<8x256xf32>
    %c0_1 = arith.constant 0 : index
    %c0_2 = arith.constant 0 : index
    %1 = vector.load %arg2[%c0_1, %c0_2] : memref<256x512xf32, #tpu.memory_space<vmem>>, vector<256x512xf32>
    %cst = arith.constant dense<0.000000e+00> : vector<8x512xf32>
    %2 = tpu.matmul %0, %1, %cst {dimension_numbers = #tpu.dot_dimension_numbers<[1], [0], [0], [1], [0, 0, 1, 1], [], []>, precision = #tpu.contract_precision<fp32>} : vector<8x256xf32>, vector<256x512xf32>, vector<8x512xf32> -> vector<8x512xf32>
    %3 = vector.extract_strided_slice %2 {offsets = [0, 0], sizes = [8, 128], strides = [1, 1]} : vector<8x512xf32> to vector<8x128xf32>
    %4 = arith.negf %3 : vector<8x128xf32>
    %5 = math.exp %4 : vector<8x128xf32>
    %cst_3 = arith.constant 1.000000e+00 : f32
    %6 = vector.broadcast %cst_3 : f32 to vector<8x128xf32>
    %7 = arith.addf %6, %5 : vector<8x128xf32>
    %8 = arith.divf %6, %7 : vector<8x128xf32>
    %9 = vector.extract_strided_slice %2 {offsets = [0, 128], sizes = [8, 128], strides = [1, 1]} : vector<8x512xf32> to vector<8x128xf32>
    %10 = arith.negf %9 : vector<8x128xf32>
    %11 = math.exp %10 : vector<8x128xf32>
    %cst_4 = arith.constant 1.000000e+00 : f32
    %12 = vector.broadcast %cst_4 : f32 to vector<8x128xf32>
    %13 = arith.addf %12, %11 : vector<8x128xf32>
    %14 = arith.divf %12, %13 : vector<8x128xf32>
    %15 = vector.extract_strided_slice %2 {offsets = [0, 256], sizes = [8, 128], strides = [1, 1]} : vector<8x512xf32> to vector<8x128xf32>
    %16 = vector.extract_strided_slice %2 {offsets = [0, 384], sizes = [8, 128], strides = [1, 1]} : vector<8x512xf32> to vector<8x128xf32>
    %17 = arith.mulf %8, %16 : vector<8x128xf32>
    %18 = arith.addf %15, %17 : vector<8x128xf32>
    %19 = math.tanh %18 : vector<8x128xf32>
    %20 = vector.extract_strided_slice %0 {offsets = [0, 128], sizes = [8, 128], strides = [1, 1]} : vector<8x256xf32> to vector<8x128xf32>
    %cst_5 = arith.constant 1.000000e+00 : f32
    %21 = vector.broadcast %cst_5 : f32 to vector<8x128xf32>
    %22 = arith.subf %21, %14 : vector<8x128xf32>
    %23 = arith.mulf %22, %19 : vector<8x128xf32>
    %24 = arith.mulf %14, %20 : vector<8x128xf32>
    %25 = arith.addf %23, %24 : vector<8x128xf32>
    %c0_6 = arith.constant 0 : index
    %c0_7 = arith.constant 0 : index
    %26 = vector.load %arg3[%c0_6, %c0_7] : memref<8x128xf32, #tpu.memory_space<vmem>>, vector<8x128xf32>
    tpu.vector_store %arg3[%c0_6, %c0_7], %25 {strides = array<i32>} : memref<8x128xf32, #tpu.memory_space<vmem>>, vector<8x128xf32>,
    return
  }
  func.func @transform_0(%arg0: i32) -> (i32, i32) {
    %c0_i32 = arith.constant 0 : i32
    %c0_i32_0 = arith.constant 0 : i32
    return %arg0, %c0_i32 : i32, i32
  }
  func.func @transform_1(%arg0: i32) -> (i32, i32) {
    %c0_i32 = arith.constant 0 : i32
    %c0_i32_0 = arith.constant 0 : i32
    %c0_i32_1 = arith.constant 0 : i32
    return %c0_i32, %c0_i32_0 : i32, i32
  }
  func.func @transform_2(%arg0: i32) -> (i32, i32) {
    %c0_i32 = arith.constant 0 : i32
    %c0_i32_0 = arith.constant 0 : i32
    return %arg0, %c0_i32 : i32, i32
  }
}

</mosaic_0001>

<llo_original>
// kernel: tpu_custom_call.1
$region0: #{tpu_custom_call.1}
  #allocation0 [shape = 'u32[]', space=smem, size = 0x4, offset = 0x4, fixed_abs, tag = 'smem constant byte address 0x4 - core index']
  #allocation1 [shape = 'u32[144,128]{1,0:T(1,128)}', space=vmem, size = 0x12000, scoped, tag = 'internal scratch']
  %s0 = inlined_call_operand.hbm [shape: f32[8,256], index: 0, kind: input, shape index: {}]
  %s1 = inlined_call_operand.hbm [shape: f32[256,512], index: 1, kind: input, shape index: {}]
  %s2 = inlined_call_operand.hbm [shape: f32[8,128], index: 2, kind: output, shape index: {}]
  %s3 = sld [smem:[#allocation0]]
  $region26: #{tpu_custom_call.1} parent=0
    _
  %s5 = ssub.s32 1, %s3
  %s6 = scalar_select 0, %s5, %s3
  $region1: #{tpu_custom_call.1} parent=0
    #allocation2 [shape = 'u8[8192]{0}', space=vmem, size = 0x2000, scoped, tag = 'input window, operand 0, single buffered']
    #allocation3 [shape = 's32[1]{0}', space=sflag, size = 0x4, scoped, tag = 'scoped memory for tpu_custom_call.1']
    #allocation4 [shape = 's32[1]{0}', space=sflag, size = 0x4, scoped, tag = 'scoped memory for tpu_custom_call.1']
    #allocation5 [shape = 'u8[524288]{0}', space=vmem, size = 0x80000, scoped, tag = 'input window, operand 1, single buffered']
    #allocation6 [shape = 's32[1]{0}', space=sflag, size = 0x4, scoped, tag = 'scoped memory for tpu_custom_call.1']
    #allocation7 [shape = 'u8[4096]{0}', space=vmem, size = 0x1000, scoped, tag = 'output window, operand 0, single buffered']
    %7 = vsyncpa [#allocation3], 0
    %8 = vsyncpa [#allocation6], 0
    %9 = vsyncpa [#allocation4], 0
    // Predicated region
    $region2: #{tpu_custom_call.1} parent=1 // pred_check
      _
    $region3: #{tpu_custom_call.1} parent=1 // pred_check_branch
      %11 = sbr.rel (0) target = $region5
    $region4: #{tpu_custom_call.1} parent=1 // pred_region
      %s13 = ssub.s32 256, 256
      %14 = vsyncadd [#allocation3], %s13
      %s16 = sshll.u32 [#allocation2], 4
      %s17 = int_to_ptr.vmem [resolvable:$true] %s16
      %19 = dma.hbm_to_vmem [thread:$0]  %s0, 256, %s17, [#allocation3]
    $region5: #{tpu_custom_call.1} parent=1 // pred_fallthru
      _
    // Predicated region
    $region6: #{tpu_custom_call.1} parent=1 // pred_check
      _
    $region7: #{tpu_custom_call.1} parent=1 // pred_check_branch
      %21 = sbr.rel (0) target = $region9
    $region8: #{tpu_custom_call.1} parent=1 // pred_region
      %s23 = ssub.s32 16384, 16384
      %24 = vsyncadd [#allocation6], %s23
      %s25 = sshll.u32 [#allocation5], 4
      %s26 = int_to_ptr.vmem [resolvable:$true] %s25
      %31 = dma.hbm_to_vmem [thread:$0]  %s1, 16384, %s26, [#allocation6], 512, 512, 32
    $region9: #{tpu_custom_call.1} parent=1 // pred_fallthru
      _
    // Predicated region
    $region10: #{tpu_custom_call.1} parent=1 // pred_check
      _
    $region11: #{tpu_custom_call.1} parent=1 // pred_check_branch
      %33 = sbr.rel (0) target = $region13
    $region12: #{tpu_custom_call.1} parent=1 // pred_region
      %34 = dma.done [#allocation3], 256
    $region13: #{tpu_custom_call.1} parent=1 // pred_fallthru
      _
    // Predicated region
    $region14: #{tpu_custom_call.1} parent=1 // pred_check
      _
    $region15: #{tpu_custom_call.1} parent=1 // pred_check_branch
      %36 = sbr.rel (0) target = $region17
    $region16: #{tpu_custom_call.1} parent=1 // pred_region
      %37 = dma.done [#allocation6], 16384
    $region17: #{tpu_custom_call.1} parent=1 // pred_fallthru
      _
    %v38 = vld [vmem:[#allocation2] sm:$0xff]
    %v39 = vld [vmem:[#allocation2 + $0x8] sm:$0xff]
    %v40 = vld [vmem:[#allocation5] sm:$0xff]
    %v41 = vld [vmem:[#allocation5 + $0x8] sm:$0xff]
    %v42 = vld [vmem:[#allocation5 + $0x10] sm:$0xff]
    %v43 = vld [vmem:[#allocation5 + $0x18] sm:$0xff]
    %v44 = vld [vmem:[#allocation5 + $0x20] sm:$0xff]
    %v45 = vld [vmem:[#allocation5 + $0x28] sm:$0xff]
    %v46 = vld [vmem:[#allocation5 + $0x30] sm:$0xff]
    %v47 = vld [vmem:[#allocation5 + $0x38] sm:$0xff]
    %v48 = vld [vmem:[#allocation5 + $0x40] sm:$0xff]
    %v49 = vld [vmem:[#allocation5 + $0x48] sm:$0xff]
    %v50 = vld [vmem:[#allocation5 + $0x50] sm:$0xff]
    %v51 = vld [vmem:[#allocation5 + $0x58] sm:$0xff]
    %v52 = vld [vmem:[#allocation5 + $0x60] sm:$0xff]
    %v53 = vld [vmem:[#allocation5 + $0x68] sm:$0xff]
    %v54 = vld [vmem:[#allocation5 + $0x70] sm:$0xff]
    %v55 = vld [vmem:[#allocation5 + $0x78] sm:$0xff]
    %v56 = vld [vmem:[#allocation5 + $0x80] sm:$0xff]
    %v57 = vld [vmem:[#allocation5 + $0x88] sm:$0xff]
    %v58 = vld [vmem:[#allocation5 + $0x90] sm:$0xff]
    %v59 = vld [vmem:[#allocation5 + $0x98] sm:$0xff]
    %v60 = vld [vmem:[#allocation5 + $0xa0] sm:$0xff]
    %v61 = vld [vmem:[#allocation5 + $0xa8] sm:$0xff]
    %v62 = vld [vmem:[#allocation5 + $0xb0] sm:$0xff]
    %v63 = vld [vmem:[#allocation5 + $0xb8] sm:$0xff]
    %v64 = vld [vmem:[#allocation5 + $0xc0] sm:$0xff]
    %v65 = vld [vmem:[#allocation5 + $0xc8] sm:$0xff]
    %v66 = vld [vmem:[#allocation5 + $0xd0] sm:$0xff]
    %v67 = vld [vmem:[#allocation5 + $0xd8] sm:$0xff]
    %v68 = vld [vmem:[#allocation5 + $0xe0] sm:$0xff]
    %v69 = vld [vmem:[#allocation5 + $0xe8] sm:$0xff]
    %v70 = vld [vmem:[#allocation5 + $0xf0] sm:$0xff]
    %v71 = vld [vmem:[#allocation5 + $0xf8] sm:$0xff]
    %v72 = vld [vmem:[#allocation5 + $0x100] sm:$0xff]
    %v73 = vld [vmem:[#allocation5 + $0x108] sm:$0xff]
    %v74 = vld [vmem:[#allocation5 + $0x110] sm:$0xff]
    %v75 = vld [vmem:[#allocation5 + $0x118] sm:$0xff]
    %v76 = vld [vmem:[#allocation5 + $0x120] sm:$0xff]
    %v77 = vld [vmem:[#allocation5 + $0x128] sm:$0xff]
    %v78 = vld [vmem:[#allocation5 + $0x130] sm:$0xff]
    %v79 = vld [vmem:[#allocation5 + $0x138] sm:$0xff]
    %v80 = vld [vmem:[#allocation5 + $0x140] sm:$0xff]
    %v81 = vld [vmem:[#allocation5 + $0x148] sm:$0xff]
    %v82 = vld [vmem:[#allocation5 + $0x150] sm:$0xff]
    %v83 = vld [vmem:[#allocation5 + $0x158] sm:$0xff]
    %v84 = vld [vmem:[#allocation5 + $0x160] sm:$0xff]
    %v85 = vld [vmem:[#allocation5 + $0x168] sm:$0xff]
    %v86 = vld [vmem:[#allocation5 + $0x170] sm:$0xff]
    %v87 = vld [vmem:[#allocation5 + $0x178] sm:$0xff]
    %v88 = vld [vmem:[#allocation5 + $0x180] sm:$0xff]
    %v89 = vld [vmem:[#allocation5 + $0x188] sm:$0xff]
    %v90 = vld [vmem:[#allocation5 + $0x190] sm:$0xff]
    %v91 = vld [vmem:[#allocation5 + $0x198] sm:$0xff]
    %v92 = vld [vmem:[#allocation5 + $0x1a0] sm:$0xff]
    %v93 = vld [vmem:[#allocation5 + $0x1a8] sm:$0xff]
    %v94 = vld [vmem:[#allocation5 + $0x1b0] sm:$0xff]
    %v95 = vld [vmem:[#allocation5 + $0x1b8] sm:$0xff]
    %v96 = vld [vmem:[#allocation5 + $0x1c0] sm:$0xff]
    %v97 = vld [vmem:[#allocation5 + $0x1c8] sm:$0xff]
    %v98 = vld [vmem:[#allocation5 + $0x1d0] sm:$0xff]
    %v99 = vld [vmem:[#allocation5 + $0x1d8] sm:$0xff]
    %v100 = vld [vmem:[#allocation5 + $0x1e0] sm:$0xff]
    %v101 = vld [vmem:[#allocation5 + $0x1e8] sm:$0xff]
    %v102 = vld [vmem:[#allocation5 + $0x1f0] sm:$0xff]
    %v103 = vld [vmem:[#allocation5 + $0x1f8] sm:$0xff]
    %v104 = vld [vmem:[#allocation5 + $0x200] sm:$0xff]
    %v105 = vld [vmem:[#allocation5 + $0x208] sm:$0xff]
    %v106 = vld [vmem:[#allocation5 + $0x210] sm:$0xff]
    %v107 = vld [vmem:[#allocation5 + $0x218] sm:$0xff]
    %v108 = vld [vmem:[#allocation5 + $0x220] sm:$0xff]
    %v109 = vld [vmem:[#allocation5 + $0x228] sm:$0xff]
    %v110 = vld [vmem:[#allocation5 + $0x230] sm:$0xff]
    %v111 = vld [vmem:[#allocation5 + $0x238] sm:$0xff]
    %v112 = vld [vmem:[#allocation5 + $0x240] sm:$0xff]
    %v113 = vld [vmem:[#allocation5 + $0x248] sm:$0xff]
    %v114 = vld [vmem:[#allocation5 + $0x250] sm:$0xff]
    %v115 = vld [vmem:[#allocation5 + $0x258] sm:$0xff]
    %v116 = vld [vmem:[#allocation5 + $0x260] sm:$0xff]
    %v117 = vld [vmem:[#allocation5 + $0x268] sm:$0xff]
    %v118 = vld [vmem:[#allocation5 + $0x270] sm:$0xff]
    %v119 = vld [vmem:[#allocation5 + $0x278] sm:$0xff]
    %v120 = vld [vmem:[#allocation5 + $0x280] sm:$0xff]
    %v121 = vld [vmem:[#allocation5 + $0x288] sm:$0xff]
    %v122 = vld [vmem:[#allocation5 + $0x290] sm:$0xff]
    %v123 = vld [vmem:[#allocation5 + $0x298] sm:$0xff]
    %v124 = vld [vmem:[#allocation5 + $0x2a0] sm:$0xff]
    %v125 = vld [vmem:[#allocation5 + $0x2a8] sm:$0xff]
    %v126 = vld [vmem:[#allocation5 + $0x2b0] sm:$0xff]
    %v127 = vld [vmem:[#allocation5 + $0x2b8] sm:$0xff]
    %v128 = vld [vmem:[#allocation5 + $0x2c0] sm:$0xff]
    %v129 = vld [vmem:[#allocation5 + $0x2c8] sm:$0xff]
    %v130 = vld [vmem:[#allocation5 + $0x2d0] sm:$0xff]
    %v131 = vld [vmem:[#allocation5 + $0x2d8] sm:$0xff]
    %v132 = vld [vmem:[#allocation5 + $0x2e0] sm:$0xff]
    %v133 = vld [vmem:[#allocation5 + $0x2e8] sm:$0xff]
    %v134 = vld [vmem:[#allocation5 + $0x2f0] sm:$0xff]
    %v135 = vld [vmem:[#allocation5 + $0x2f8] sm:$0xff]
    %v136 = vld [vmem:[#allocation5 + $0x300] sm:$0xff]
    %v137 = vld [vmem:[#allocation5 + $0x308] sm:$0xff]
    %v138 = vld [vmem:[#allocation5 + $0x310] sm:$0xff]
    %v139 = vld [vmem:[#allocation5 + $0x318] sm:$0xff]
    %v140 = vld [vmem:[#allocation5 + $0x320] sm:$0xff]
    %v141 = vld [vmem:[#allocation5 + $0x328] sm:$0xff]
    %v142 = vld [vmem:[#allocation5 + $0x330] sm:$0xff]
    %v143 = vld [vmem:[#allocation5 + $0x338] sm:$0xff]
    %v144 = vld [vmem:[#allocation5 + $0x340] sm:$0xff]
    %v145 = vld [vmem:[#allocation5 + $0x348] sm:$0xff]
    %v146 = vld [vmem:[#allocation5 + $0x350] sm:$0xff]
    %v147 = vld [vmem:[#allocation5 + $0x358] sm:$0xff]
    %v148 = vld [vmem:[#allocation5 + $0x360] sm:$0xff]
    %v149 = vld [vmem:[#allocation5 + $0x368] sm:$0xff]
    %v150 = vld [vmem:[#allocation5 + $0x370] sm:$0xff]
    %v151 = vld [vmem:[#allocation5 + $0x378] sm:$0xff]
    %v152 = vld [vmem:[#allocation5 + $0x380] sm:$0xff]
    %v153 = vld [vmem:[#allocation5 + $0x388] sm:$0xff]
    %v154 = vld [vmem:[#allocation5 + $0x390] sm:$0xff]
    %v155 = vld [vmem:[#allocation5 + $0x398] sm:$0xff]
    %v156 = vld [vmem:[#allocation5 + $0x3a0] sm:$0xff]
    %v157 = vld [vmem:[#allocation5 + $0x3a8] sm:$0xff]
    %v158 = vld [vmem:[#allocation5 + $0x3b0] sm:$0xff]
    %v159 = vld [vmem:[#allocation5 + $0x3b8] sm:$0xff]
    %v160 = vld [vmem:[#allocation5 + $0x3c0] sm:$0xff]
    %v161 = vld [vmem:[#allocation5 + $0x3c8] sm:$0xff]
    %v162 = vld [vmem:[#allocation5 + $0x3d0] sm:$0xff]
    %v163 = vld [vmem:[#allocation5 + $0x3d8] sm:$0xff]
    %v164 = vld [vmem:[#allocation5 + $0x3e0] sm:$0xff]
    %v165 = vld [vmem:[#allocation5 + $0x3e8] sm:$0xff]
    %v166 = vld [vmem:[#allocation5 + $0x3f0] sm:$0xff]
    %v167 = vld [vmem:[#allocation5 + $0x3f8] sm:$0xff]
    %v168 = vand.u32 %v41, 4294901760
    %169 = vmatprep.subr.mxu0 %v168
    %v170 = vand.u32 %v40, 4294901760
    %171 = vmatpush1.msra.mxu0 %v170
    %v172 = vand.u32 %v45, 4294901760
    %173 = vmatprep.subr.mxu0 %v172
    %v174 = vand.u32 %v44, 4294901760
    %175 = vmatpush1.msra.mxu0 %v174
    %v176 = vand.u32 %v49, 4294901760
    %177 = vmatprep.subr.mxu0 %v176
    %v178 = vand.u32 %v48, 4294901760
    %179 = vmatpush1.msra.mxu0 %v178
    %v180 = vand.u32 %v53, 4294901760
    %181 = vmatprep.subr.mxu0 %v180
    %v182 = vand.u32 %v52, 4294901760
    %183 = vmatpush1.msra.mxu0 %v182
    %v184 = vand.u32 %v57, 4294901760
    %185 = vmatprep.subr.mxu0 %v184
    %v186 = vand.u32 %v56, 4294901760
    %187 = vmatpush1.msra.mxu0 %v186
    %v188 = vand.u32 %v61, 4294901760
    %189 = vmatprep.subr.mxu0 %v188
    %v190 = vand.u32 %v60, 4294901760
    %191 = vmatpush1.msra.mxu0 %v190
    %v192 = vand.u32 %v65, 4294901760
    %193 = vmatprep.subr.mxu0 %v192
    %v194 = vand.u32 %v64, 4294901760
    %195 = vmatpush1.msra.mxu0 %v194
    %v196 = vand.u32 %v69, 4294901760
    %197 = vmatprep.subr.mxu0 %v196
    %v198 = vand.u32 %v68, 4294901760
    %199 = vmatpush1.msra.mxu0 %v198
    %v200 = vand.u32 %v73, 4294901760
    %201 = vmatprep.subr.mxu0 %v200
    %v202 = vand.u32 %v72, 4294901760
    %203 = vmatpush1.msra.mxu0 %v202
    %v204 = vand.u32 %v77, 4294901760
    %205 = vmatprep.subr.mxu0 %v204
    %v206 = vand.u32 %v76, 4294901760
    %207 = vmatpush1.msra.mxu0 %v206
    %v208 = vand.u32 %v81, 4294901760
    %209 = vmatprep.subr.mxu0 %v208
    %v210 = vand.u32 %v80, 4294901760
    %211 = vmatpush1.msra.mxu0 %v210
    %v212 = vand.u32 %v85, 4294901760
    %213 = vmatprep.subr.mxu0 %v212
    %v214 = vand.u32 %v84, 4294901760
    %215 = vmatpush1.msra.mxu0 %v214
    %v216 = vand.u32 %v89, 4294901760
    %217 = vmatprep.subr.mxu0 %v216
    %v218 = vand.u32 %v88, 4294901760
    %219 = vmatpush1.msra.mxu0 %v218
    %v220 = vand.u32 %v93, 4294901760
    %221 = vmatprep.subr.mxu0 %v220
    %v222 = vand.u32 %v92, 4294901760
    %223 = vmatpush1.msra.mxu0 %v222
    %v224 = vand.u32 %v97, 4294901760
    %225 = vmatprep.subr.mxu0 %v224
    %v226 = vand.u32 %v96, 4294901760
    %227 = vmatpush1.msra.mxu0 %v226
    %v228 = vand.u32 %v101, 4294901760
    %229 = vmatprep.subr.mxu0 %v228
    %v230 = vand.u32 %v100, 4294901760
    %231 = vmatpush1.msra.mxu0 %v230
    %v232 = vand.u32 %v105, 4294901760
    %233 = vmatprep.subr.mxu0 %v232
    %v234 = vand.u32 %v104, 4294901760
    %235 = vmatpush1.msra.mxu0 %v234
    %v236 = vand.u32 %v109, 4294901760
    %237 = vmatprep.subr.mxu0 %v236
    %v238 = vand.u32 %v108, 4294901760
    %239 = vmatpush1.msra.mxu0 %v238
    %v240 = vand.u32 %v113, 4294901760
    %241 = vmatprep.subr.mxu0 %v240
    %v242 = vand.u32 %v112, 4294901760
    %243 = vmatpush1.msra.mxu0 %v242
    %v244 = vand.u32 %v117, 4294901760
    %245 = vmatprep.subr.mxu0 %v244
    %v246 = vand.u32 %v116, 4294901760
    %247 = vmatpush1.msra.mxu0 %v246
    %v248 = vand.u32 %v121, 4294901760
    %249 = vmatprep.subr.mxu0 %v248
    %v250 = vand.u32 %v120, 4294901760
    %251 = vmatpush1.msra.mxu0 %v250
    %v252 = vand.u32 %v125, 4294901760
    %253 = vmatprep.subr.mxu0 %v252
    %v254 = vand.u32 %v124, 4294901760
    %255 = vmatpush1.msra.mxu0 %v254
    %v256 = vand.u32 %v129, 4294901760
    %257 = vmatprep.subr.mxu0 %v256
    %v258 = vand.u32 %v128, 4294901760
    %259 = vmatpush1.msra.mxu0 %v258
    %v260 = vand.u32 %v133, 4294901760
    %261 = vmatprep.subr.mxu0 %v260
    %v262 = vand.u32 %v132, 4294901760
    %263 = vmatpush1.msra.mxu0 %v262
    %v264 = vand.u32 %v137, 4294901760
    %265 = vmatprep.subr.mxu0 %v264
    %v266 = vand.u32 %v136, 4294901760
    %267 = vmatpush1.msra.mxu0 %v266
    %v268 = vand.u32 %v141, 4294901760
    %269 = vmatprep.subr.mxu0 %v268
    %v270 = vand.u32 %v140, 4294901760
    %271 = vmatpush1.msra.mxu0 %v270
    %v272 = vand.u32 %v145, 4294901760
    %273 = vmatprep.subr.mxu0 %v272
    %v274 = vand.u32 %v144, 4294901760
    %275 = vmatpush1.msra.mxu0 %v274
    %v276 = vand.u32 %v149, 4294901760
    %277 = vmatprep.subr.mxu0 %v276
    %v278 = vand.u32 %v148, 4294901760
    %279 = vmatpush1.msra.mxu0 %v278
    %v280 = vand.u32 %v153, 4294901760
    %281 = vmatprep.subr.mxu0 %v280
    %v282 = vand.u32 %v152, 4294901760
    %283 = vmatpush1.msra.mxu0 %v282
    %v284 = vand.u32 %v157, 4294901760
    %285 = vmatprep.subr.mxu0 %v284
    %v286 = vand.u32 %v156, 4294901760
    %287 = vmatpush1.msra.mxu0 %v286
    %v288 = vand.u32 %v161, 4294901760
    %289 = vmatprep.subr.mxu0 %v288
    %v290 = vand.u32 %v160, 4294901760
    %291 = vmatpush1.msra.mxu0 %v290
    %v292 = vand.u32 %v165, 4294901760
    %293 = vmatprep.subr.mxu0 %v292
    %v294 = vand.u32 %v164, 4294901760
    %295 = vmatpush1.msra.mxu0 %v294
    %v296 = vand.u32 %v39, 4294901760
    %v297 = vsub.f32 %v39, %v296
    %v298 = vand.u32 %v297, 4294901760
    %v299 = vsub.f32 %v297, %v298
    %v300 = vand.u32 %v299, 4294901760
    %301 = vmatprep.mubr.f32.mxu0 %v300
    %v302 = vand.u32 %v38, 4294901760
    %v303 = vsub.f32 %v38, %v302
    %v304 = vand.u32 %v303, 4294901760
    %v305 = vsub.f32 %v303, %v304
    %v306 = vand.u32 %v305, 4294901760
    %307 = vmatmul.mubr.f32.gmra.mrb[0].mxu0 %v306
    %v308 = vpop.f32.mrb[0].mxu0
    %v309 = vadd.f32 0.0, %v308
    %v310 = vpop.f32.mrb[0].mxu0
    %v311 = vadd.f32 0.0, %v310
    %312 = vdwg.mxu0
    %v313 = vand.u32 %v41, 4294901760
    %v314 = vsub.f32 %v41, %v313
    %v315 = vand.u32 %v314, 4294901760
    %v316 = vsub.f32 %v314, %v315
    %v317 = vand.u32 %v316, 4294901760
    %318 = vmatprep.subr.mxu0 %v317
    %v319 = vand.u32 %v40, 4294901760
    %v320 = vsub.f32 %v40, %v319
    %v321 = vand.u32 %v320, 4294901760
    %v322 = vsub.f32 %v320, %v321
    %v323 = vand.u32 %v322, 4294901760
    %324 = vmatpush1.msra.mxu0 %v323
    %v325 = vand.u32 %v45, 4294901760
    %v326 = vsub.f32 %v45, %v325
    %v327 = vand.u32 %v326, 4294901760
    %v328 = vsub.f32 %v326, %v327
    %v329 = vand.u32 %v328, 4294901760
    %330 = vmatprep.subr.mxu0 %v329
    %v331 = vand.u32 %v44, 4294901760
    %v332 = vsub.f32 %v44, %v331
    %v333 = vand.u32 %v332, 4294901760
    %v334 = vsub.f32 %v332, %v333
    %v335 = vand.u32 %v334, 4294901760
    %336 = vmatpush1.msra.mxu0 %v335
    %v337 = vand.u32 %v49, 4294901760
    %v338 = vsub.f32 %v49, %v337
    %v339 = vand.u32 %v338, 4294901760
    %v340 = vsub.f32 %v338, %v339
    %v341 = vand.u32 %v340, 4294901760
    %342 = vmatprep.subr.mxu0 %v341
    %v343 = vand.u32 %v48, 4294901760
    %v344 = vsub.f32 %v48, %v343
    %v345 = vand.u32 %v344, 4294901760
    %v346 = vsub.f32 %v344, %v345
    %v347 = vand.u32 %v346, 4294901760
    %348 = vmatpush1.msra.mxu0 %v347
    %v349 = vand.u32 %v53, 4294901760
    %v350 = vsub.f32 %v53, %v349
    %v351 = vand.u32 %v350, 4294901760
    %v352 = vsub.f32 %v350, %v351
    %v353 = vand.u32 %v352, 4294901760
    %354 = vmatprep.subr.mxu0 %v353
    %v355 = vand.u32 %v52, 4294901760
    %v356 = vsub.f32 %v52, %v355
    %v357 = vand.u32 %v356, 4294901760
    %v358 = vsub.f32 %v356, %v357
    %v359 = vand.u32 %v358, 4294901760
    %360 = vmatpush1.msra.mxu0 %v359
    %v361 = vand.u32 %v57, 4294901760
    %v362 = vsub.f32 %v57, %v361
    %v363 = vand.u32 %v362, 4294901760
    %v364 = vsub.f32 %v362, %v363
    %v365 = vand.u32 %v364, 4294901760
    %366 = vmatprep.subr.mxu0 %v365
    %v367 = vand.u32 %v56, 4294901760
    %v368 = vsub.f32 %v56, %v367
    %v369 = vand.u32 %v368, 4294901760
    %v370 = vsub.f32 %v368, %v369
    %v371 = vand.u32 %v370, 4294901760
    %372 = vmatpush1.msra.mxu0 %v371
    %v373 = vand.u32 %v61, 4294901760
    %v374 = vsub.f32 %v61, %v373
    %v375 = vand.u32 %v374, 4294901760
    %v376 = vsub.f32 %v374, %v375
    %v377 = vand.u32 %v376, 4294901760
    %378 = vmatprep.subr.mxu0 %v377
    %v379 = vand.u32 %v60, 4294901760
    %v380 = vsub.f32 %v60, %v379
    %v381 = vand.u32 %v380, 4294901760
    %v382 = vsub.f32 %v380, %v381
    %v383 = vand.u32 %v382, 4294901760
    %384 = vmatpush1.msra.mxu0 %v383
    %v385 = vand.u32 %v65, 4294901760
    %v386 = vsub.f32 %v65, %v385
    %v387 = vand.u32 %v386, 4294901760
    %v388 = vsub.f32 %v386, %v387
    %v389 = vand.u32 %v388, 4294901760
    %390 = vmatprep.subr.mxu0 %v389
    %v391 = vand.u32 %v64, 4294901760
    %v392 = vsub.f32 %v64, %v391
    %v393 = vand.u32 %v392, 4294901760
    %v394 = vsub.f32 %v392, %v393
    %v395 = vand.u32 %v394, 4294901760
    %396 = vmatpush1.msra.mxu0 %v395
    %v397 = vand.u32 %v69, 4294901760
    %v398 = vsub.f32 %v69, %v397
    %v399 = vand.u32 %v398, 4294901760
    %v400 = vsub.f32 %v398, %v399
    %v401 = vand.u32 %v400, 4294901760
    %402 = vmatprep.subr.mxu0 %v401
    %v403 = vand.u32 %v68, 4294901760
    %v404 = vsub.f32 %v68, %v403
    %v405 = vand.u32 %v404, 4294901760
    %v406 = vsub.f32 %v404, %v405
    %v407 = vand.u32 %v406, 4294901760
    %408 = vmatpush1.msra.mxu0 %v407
    %v409 = vand.u32 %v73, 4294901760
    %v410 = vsub.f32 %v73, %v409
    %v411 = vand.u32 %v410, 4294901760
    %v412 = vsub.f32 %v410, %v411
    %v413 = vand.u32 %v412, 4294901760
    %414 = vmatprep.subr.mxu0 %v413
    %v415 = vand.u32 %v72, 4294901760
    %v416 = vsub.f32 %v72, %v415
    %v417 = vand.u32 %v416, 4294901760
    %v418 = vsub.f32 %v416, %v417
    %v419 = vand.u32 %v418, 4294901760
    %420 = vmatpush1.msra.mxu0 %v419
    %v421 = vand.u32 %v77, 4294901760
    %v422 = vsub.f32 %v77, %v421
    %v423 = vand.u32 %v422, 4294901760
    %v424 = vsub.f32 %v422, %v423
    %v425 = vand.u32 %v424, 4294901760
    %426 = vmatprep.subr.mxu0 %v425
    %v427 = vand.u32 %v76, 4294901760
    %v428 = vsub.f32 %v76, %v427
    %v429 = vand.u32 %v428, 4294901760
    %v430 = vsub.f32 %v428, %v429
    %v431 = vand.u32 %v430, 4294901760
    %432 = vmatpush1.msra.mxu0 %v431
    %v433 = vand.u32 %v81, 4294901760
    %v434 = vsub.f32 %v81, %v433
    %v435 = vand.u32 %v434, 4294901760
    %v436 = vsub.f32 %v434, %v435
    %v437 = vand.u32 %v436, 4294901760
    %438 = vmatprep.subr.mxu0 %v437
    %v439 = vand.u32 %v80, 4294901760
    %v440 = vsub.f32 %v80, %v439
    %v441 = vand.u32 %v440, 4294901760
    %v442 = vsub.f32 %v440, %v441
    %v443 = vand.u32 %v442, 4294901760
    %444 = vmatpush1.msra.mxu0 %v443
    %v445 = vand.u32 %v85, 4294901760
    %v446 = vsub.f32 %v85, %v445
    %v447 = vand.u32 %v446, 4294901760
    %v448 = vsub.f32 %v446, %v447
    %v449 = vand.u32 %v448, 4294901760
    %450 = vmatprep.subr.mxu0 %v449
    %v451 = vand.u32 %v84, 4294901760
    %v452 = vsub.f32 %v84, %v451
    %v453 = vand.u32 %v452, 4294901760
    %v454 = vsub.f32 %v452, %v453
    %v455 = vand.u32 %v454, 4294901760
    %456 = vmatpush1.msra.mxu0 %v455
    %v457 = vand.u32 %v89, 4294901760
    %v458 = vsub.f32 %v89, %v457
    %v459 = vand.u32 %v458, 4294901760
    %v460 = vsub.f32 %v458, %v459
    %v461 = vand.u32 %v460, 4294901760
    %462 = vmatprep.subr.mxu0 %v461
    %v463 = vand.u32 %v88, 4294901760
    %v464 = vsub.f32 %v88, %v463
    %v465 = vand.u32 %v464, 4294901760
    %v466 = vsub.f32 %v464, %v465
    %v467 = vand.u32 %v466, 4294901760
    %468 = vmatpush1.msra.mxu0 %v467
    %v469 = vand.u32 %v93, 4294901760
    %v470 = vsub.f32 %v93, %v469
    %v471 = vand.u32 %v470, 4294901760
    %v472 = vsub.f32 %v470, %v471
    %v473 = vand.u32 %v472, 4294901760
    %474 = vmatprep.subr.mxu0 %v473
    %v475 = vand.u32 %v92, 4294901760
    %v476 = vsub.f32 %v92, %v475
    %v477 = vand.u32 %v476, 4294901760
    %v478 = vsub.f32 %v476, %v477
    %v479 = vand.u32 %v478, 4294901760
    %480 = vmatpush1.msra.mxu0 %v479
    %v481 = vand.u32 %v97, 4294901760
    %v482 = vsub.f32 %v97, %v481
    %v483 = vand.u32 %v482, 4294901760
    %v484 = vsub.f32 %v482, %v483
    %v485 = vand.u32 %v484, 4294901760
    %486 = vmatprep.subr.mxu0 %v485
    %v487 = vand.u32 %v96, 4294901760
    %v488 = vsub.f32 %v96, %v487
    %v489 = vand.u32 %v488, 4294901760
    %v490 = vsub.f32 %v488, %v489
    %v491 = vand.u32 %v490, 4294901760
    %492 = vmatpush1.msra.mxu0 %v491
    %v493 = vand.u32 %v101, 4294901760
    %v494 = vsub.f32 %v101, %v493
    %v495 = vand.u32 %v494, 4294901760
    %v496 = vsub.f32 %v494, %v495
    %v497 = vand.u32 %v496, 4294901760
    %498 = vmatprep.subr.mxu0 %v497
    %v499 = vand.u32 %v100, 4294901760
    %v500 = vsub.f32 %v100, %v499
    %v501 = vand.u32 %v500, 4294901760
    %v502 = vsub.f32 %v500, %v501
    %v503 = vand.u32 %v502, 4294901760
    %504 = vmatpush1.msra.mxu0 %v503
    %v505 = vand.u32 %v105, 4294901760
    %v506 = vsub.f32 %v105, %v505
    %v507 = vand.u32 %v506, 4294901760
    %v508 = vsub.f32 %v506, %v507
    %v509 = vand.u32 %v508, 4294901760
    %510 = vmatprep.subr.mxu0 %v509
    %v511 = vand.u32 %v104, 4294901760
    %v512 = vsub.f32 %v104, %v511
    %v513 = vand.u32 %v512, 4294901760
    %v514 = vsub.f32 %v512, %v513
    %v515 = vand.u32 %v514, 4294901760
    %516 = vmatpush1.msra.mxu0 %v515
    %v517 = vand.u32 %v109, 4294901760
    %v518 = vsub.f32 %v109, %v517
    %v519 = vand.u32 %v518, 4294901760
    %v520 = vsub.f32 %v518, %v519
    %v521 = vand.u32 %v520, 4294901760
    %522 = vmatprep.subr.mxu0 %v521
    %v523 = vand.u32 %v108, 4294901760
    %v524 = vsub.f32 %v108, %v523
    %v525 = vand.u32 %v524, 4294901760
    %v526 = vsub.f32 %v524, %v525
    %v527 = vand.u32 %v526, 4294901760
    %528 = vmatpush1.msra.mxu0 %v527
    %v529 = vand.u32 %v113, 4294901760
    %v530 = vsub.f32 %v113, %v529
    %v531 = vand.u32 %v530, 4294901760
    %v532 = vsub.f32 %v530, %v531
    %v533 = vand.u32 %v532, 4294901760
    %534 = vmatprep.subr.mxu0 %v533
    %v535 = vand.u32 %v112, 4294901760
    %v536 = vsub.f32 %v112, %v535
    %v537 = vand.u32 %v536, 4294901760
    %v538 = vsub.f32 %v536, %v537
    %v539 = vand.u32 %v538, 4294901760
    %540 = vmatpush1.msra.mxu0 %v539
    %v541 = vand.u32 %v117, 4294901760
    %v542 = vsub.f32 %v117, %v541
    %v543 = vand.u32 %v542, 4294901760
    %v544 = vsub.f32 %v542, %v543
    %v545 = vand.u32 %v544, 4294901760
    %546 = vmatprep.subr.mxu0 %v545
    %v547 = vand.u32 %v116, 4294901760
    %v548 = vsub.f32 %v116, %v547
    %v549 = vand.u32 %v548, 4294901760
    %v550 = vsub.f32 %v548, %v549
    %v551 = vand.u32 %v550, 4294901760
    %552 = vmatpush1.msra.mxu0 %v551
    %v553 = vand.u32 %v121, 4294901760
    %v554 = vsub.f32 %v121, %v553
    %v555 = vand.u32 %v554, 4294901760
    %v556 = vsub.f32 %v554, %v555
    %v557 = vand.u32 %v556, 4294901760
    %558 = vmatprep.subr.mxu0 %v557
    %v559 = vand.u32 %v120, 4294901760
    %v560 = vsub.f32 %v120, %v559
    %v561 = vand.u32 %v560, 4294901760
    %v562 = vsub.f32 %v560, %v561
    %v563 = vand.u32 %v562, 4294901760
    %564 = vmatpush1.msra.mxu0 %v563
    %v565 = vand.u32 %v125, 4294901760
    %v566 = vsub.f32 %v125, %v565
    %v567 = vand.u32 %v566, 4294901760
    %v568 = vsub.f32 %v566, %v567
    %v569 = vand.u32 %v568, 4294901760
    %570 = vmatprep.subr.mxu0 %v569
    %v571 = vand.u32 %v124, 4294901760
    %v572 = vsub.f32 %v124, %v571
    %v573 = vand.u32 %v572, 4294901760
    %v574 = vsub.f32 %v572, %v573
    %v575 = vand.u32 %v574, 4294901760
    %576 = vmatpush1.msra.mxu0 %v575
    %v577 = vand.u32 %v129, 4294901760
    %v578 = vsub.f32 %v129, %v577
    %v579 = vand.u32 %v578, 4294901760
    %v580 = vsub.f32 %v578, %v579
    %v581 = vand.u32 %v580, 4294901760
    %582 = vmatprep.subr.mxu0 %v581
    %v583 = vand.u32 %v128, 4294901760
    %v584 = vsub.f32 %v128, %v583
    %v585 = vand.u32 %v584, 4294901760
    %v586 = vsub.f32 %v584, %v585
    %v587 = vand.u32 %v586, 4294901760
    %588 = vmatpush1.msra.mxu0 %v587
    %v589 = vand.u32 %v133, 4294901760
    %v590 = vsub.f32 %v133, %v589
    %v591 = vand.u32 %v590, 4294901760
    %v592 = vsub.f32 %v590, %v591
    %v593 = vand.u32 %v592, 4294901760
    %594 = vmatprep.subr.mxu0 %v593
    %v595 = vand.u32 %v132, 4294901760
    %v596 = vsub.f32 %v132, %v595
    %v597 = vand.u32 %v596, 4294901760
    %v598 = vsub.f32 %v596, %v597
    %v599 = vand.u32 %v598, 4294901760
    %600 = vmatpush1.msra.mxu0 %v599
    %v601 = vand.u32 %v137, 4294901760
    %v602 = vsub.f32 %v137, %v601
    %v603 = vand.u32 %v602, 4294901760
    %v604 = vsub.f32 %v602, %v603
    %v605 = vand.u32 %v604, 4294901760
    %606 = vmatprep.subr.mxu0 %v605
    %v607 = vand.u32 %v136, 4294901760
    %v608 = vsub.f32 %v136, %v607
    %v609 = vand.u32 %v608, 4294901760
    %v610 = vsub.f32 %v608, %v609
    %v611 = vand.u32 %v610, 4294901760
    %612 = vmatpush1.msra.mxu0 %v611
    %v613 = vand.u32 %v141, 4294901760
    %v614 = vsub.f32 %v141, %v613
    %v615 = vand.u32 %v614, 4294901760
    %v616 = vsub.f32 %v614, %v615
    %v617 = vand.u32 %v616, 4294901760
    %618 = vmatprep.subr.mxu0 %v617
    %v619 = vand.u32 %v140, 4294901760
    %v620 = vsub.f32 %v140, %v619
    %v621 = vand.u32 %v620, 4294901760
    %v622 = vsub.f32 %v620, %v621
    %v623 = vand.u32 %v622, 4294901760
    %624 = vmatpush1.msra.mxu0 %v623
    %v625 = vand.u32 %v145, 4294901760
    %v626 = vsub.f32 %v145, %v625
    %v627 = vand.u32 %v626, 4294901760
    %v628 = vsub.f32 %v626, %v627
    %v629 = vand.u32 %v628, 4294901760
    %630 = vmatprep.subr.mxu0 %v629
    %v631 = vand.u32 %v144, 4294901760
    %v632 = vsub.f32 %v144, %v631
    %v633 = vand.u32 %v632, 4294901760
    %v634 = vsub.f32 %v632, %v633
    %v635 = vand.u32 %v634, 4294901760
    %636 = vmatpush1.msra.mxu0 %v635
    %v637 = vand.u32 %v149, 4294901760
    %v638 = vsub.f32 %v149, %v637
    %v639 = vand.u32 %v638, 4294901760
    %v640 = vsub.f32 %v638, %v639
    %v641 = vand.u32 %v640, 4294901760
    %642 = vmatprep.subr.mxu0 %v641
    %v643 = vand.u32 %v148, 4294901760
    %v644 = vsub.f32 %v148, %v643
    %v645 = vand.u32 %v644, 4294901760
    %v646 = vsub.f32 %v644, %v645
    %v647 = vand.u32 %v646, 4294901760
    %648 = vmatpush1.msra.mxu0 %v647
    %v649 = vand.u32 %v153, 4294901760
    %v650 = vsub.f32 %v153, %v649
    %v651 = vand.u32 %v650, 4294901760
    %v652 = vsub.f32 %v650, %v651
    %v653 = vand.u32 %v652, 4294901760
    %654 = vmatprep.subr.mxu0 %v653
    %v655 = vand.u32 %v152, 4294901760
    %v656 = vsub.f32 %v152, %v655
    %v657 = vand.u32 %v656, 4294901760
    %v658 = vsub.f32 %v656, %v657
    %v659 = vand.u32 %v658, 4294901760
    %660 = vmatpush1.msra.mxu0 %v659
    %v661 = vand.u32 %v157, 4294901760
    %v662 = vsub.f32 %v157, %v661
    %v663 = vand.u32 %v662, 4294901760
    %v664 = vsub.f32 %v662, %v663
    %v665 = vand.u32 %v664, 4294901760
    %666 = vmatprep.subr.mxu0 %v665
    %v667 = vand.u32 %v156, 4294901760
    %v668 = vsub.f32 %v156, %v667
    %v669 = vand.u32 %v668, 4294901760
    %v670 = vsub.f32 %v668, %v669
    %v671 = vand.u32 %v670, 4294901760
    %672 = vmatpush1.msra.mxu0 %v671
    %v673 = vand.u32 %v161, 4294901760
    %v674 = vsub.f32 %v161, %v673
    %v675 = vand.u32 %v674, 4294901760
    %v676 = vsub.f32 %v674, %v675
    %v677 = vand.u32 %v676, 4294901760
    %678 = vmatprep.subr.mxu0 %v677
    %v679 = vand.u32 %v160, 4294901760
    %v680 = vsub.f32 %v160, %v679
    %v681 = vand.u32 %v680, 4294901760
    %v682 = vsub.f32 %v680, %v681
    %v683 = vand.u32 %v682, 4294901760
    %684 = vmatpush1.msra.mxu0 %v683
    %v685 = vand.u32 %v165, 4294901760
    %v686 = vsub.f32 %v165, %v685
    %v687 = vand.u32 %v686, 4294901760
    %v688 = vsub.f32 %v686, %v687
    %v689 = vand.u32 %v688, 4294901760
    %690 = vmatprep.subr.mxu0 %v689
    %v691 = vand.u32 %v164, 4294901760
    %v692 = vsub.f32 %v164, %v691
    %v693 = vand.u32 %v692, 4294901760
    %v694 = vsub.f32 %v692, %v693
    %v695 = vand.u32 %v694, 4294901760
    %696 = vmatpush1.msra.mxu0 %v695
    %v697 = vand.u32 %v39, 4294901760
    %698 = vmatprep.mubr.f32.mxu0 %v697
    %v699 = vand.u32 %v38, 4294901760
    %700 = vmatmul.mubr.f32.gmra.mrb[0].mxu0 %v699
    %v701 = vpop.f32.mrb[0].mxu0
    %v702 = vadd.f32 %v309, %v701
    %v703 = vpop.f32.mrb[0].mxu0
    %v704 = vadd.f32 %v311, %v703
    %705 = vdwg.mxu0
    %v706 = vand.u32 %v41, 4294901760
    %v707 = vsub.f32 %v41, %v706
    %708 = vmatprep.subr.mxu0 %v707
    %v709 = vand.u32 %v40, 4294901760
    %v710 = vsub.f32 %v40, %v709
    %711 = vmatpush1.msra.mxu0 %v710
    %v712 = vand.u32 %v45, 4294901760
    %v713 = vsub.f32 %v45, %v712
    %714 = vmatprep.subr.mxu0 %v713
    %v715 = vand.u32 %v44, 4294901760
    %v716 = vsub.f32 %v44, %v715
    %717 = vmatpush1.msra.mxu0 %v716
    %v718 = vand.u32 %v49, 4294901760
    %v719 = vsub.f32 %v49, %v718
    %720 = vmatprep.subr.mxu0 %v719
    %v721 = vand.u32 %v48, 4294901760
    %v722 = vsub.f32 %v48, %v721
    %723 = vmatpush1.msra.mxu0 %v722
    %v724 = vand.u32 %v53, 4294901760
    %v725 = vsub.f32 %v53, %v724
    %726 = vmatprep.subr.mxu0 %v725
    %v727 = vand.u32 %v52, 4294901760
    %v728 = vsub.f32 %v52, %v727
    %729 = vmatpush1.msra.mxu0 %v728
    %v730 = vand.u32 %v57, 4294901760
    %v731 = vsub.f32 %v57, %v730
    %732 = vmatprep.subr.mxu0 %v731
    %v733 = vand.u32 %v56, 4294901760
    %v734 = vsub.f32 %v56, %v733
    %735 = vmatpush1.msra.mxu0 %v734
    %v736 = vand.u32 %v61, 4294901760
    %v737 = vsub.f32 %v61, %v736
    %738 = vmatprep.subr.mxu0 %v737
    %v739 = vand.u32 %v60, 4294901760
    %v740 = vsub.f32 %v60, %v739
    %741 = vmatpush1.msra.mxu0 %v740
    %v742 = vand.u32 %v65, 4294901760
    %v743 = vsub.f32 %v65, %v742
    %744 = vmatprep.subr.mxu0 %v743
    %v745 = vand.u32 %v64, 4294901760
    %v746 = vsub.f32 %v64, %v745
    %747 = vmatpush1.msra.mxu0 %v746
    %v748 = vand.u32 %v69, 4294901760
    %v749 = vsub.f32 %v69, %v748
    %750 = vmatprep.subr.mxu0 %v749
    %v751 = vand.u32 %v68, 4294901760
    %v752 = vsub.f32 %v68, %v751
    %753 = vmatpush1.msra.mxu0 %v752
    %v754 = vand.u32 %v73, 4294901760
    %v755 = vsub.f32 %v73, %v754
    %756 = vmatprep.subr.mxu0 %v755
    %v757 = vand.u32 %v72, 4294901760
    %v758 = vsub.f32 %v72, %v757
    %759 = vmatpush1.msra.mxu0 %v758
    %v760 = vand.u32 %v77, 4294901760
    %v761 = vsub.f32 %v77, %v760
    %762 = vmatprep.subr.mxu0 %v761
    %v763 = vand.u32 %v76, 4294901760
    %v764 = vsub.f32 %v76, %v763
    %765 = vmatpush1.msra.mxu0 %v764
    %v766 = vand.u32 %v81, 4294901760
    %v767 = vsub.f32 %v81, %v766
    %768 = vmatprep.subr.mxu0 %v767
    %v769 = vand.u32 %v80, 4294901760
    %v770 = vsub.f32 %v80, %v769
    %771 = vmatpush1.msra.mxu0 %v770
    %v772 = vand.u32 %v85, 4294901760
    %v773 = vsub.f32 %v85, %v772
    %774 = vmatprep.subr.mxu0 %v773
    %v775 = vand.u32 %v84, 4294901760
    %v776 = vsub.f32 %v84, %v775
    %777 = vmatpush1.msra.mxu0 %v776
    %v778 = vand.u32 %v89, 4294901760
    %v779 = vsub.f32 %v89, %v778
    %780 = vmatprep.subr.mxu0 %v779
    %v781 = vand.u32 %v88, 4294901760
    %v782 = vsub.f32 %v88, %v781
    %783 = vmatpush1.msra.mxu0 %v782
    %v784 = vand.u32 %v93, 4294901760
    %v785 = vsub.f32 %v93, %v784
    %786 = vmatprep.subr.mxu0 %v785
    %v787 = vand.u32 %v92, 4294901760
    %v788 = vsub.f32 %v92, %v787
    %789 = vmatpush1.msra.mxu0 %v788
    %v790 = vand.u32 %v97, 4294901760
    %v791 = vsub.f32 %v97, %v790
    %792 = vmatprep.subr.mxu0 %v791
    %v793 = vand.u32 %v96, 4294901760
    %v794 = vsub.f32 %v96, %v793
    %795 = vmatpush1.msra.mxu0 %v794
    %v796 = vand.u32 %v101, 4294901760
    %v797 = vsub.f32 %v101, %v796
    %798 = vmatprep.subr.mxu0 %v797
    %v799 = vand.u32 %v100, 4294901760
    %v800 = vsub.f32 %v100, %v799
    %801 = vmatpush1.msra.mxu0 %v800
    %v802 = vand.u32 %v105, 4294901760
    %v803 = vsub.f32 %v105, %v802
    %804 = vmatprep.subr.mxu0 %v803
    %v805 = vand.u32 %v104, 4294901760
    %v806 = vsub.f32 %v104, %v805
    %807 = vmatpush1.msra.mxu0 %v806
    %v808 = vand.u32 %v109, 4294901760
    %v809 = vsub.f32 %v109, %v808
    %810 = vmatprep.subr.mxu0 %v809
    %v811 = vand.u32 %v108, 4294901760
    %v812 = vsub.f32 %v108, %v811
    %813 = vmatpush1.msra.mxu0 %v812
    %v814 = vand.u32 %v113, 4294901760
    %v815 = vsub.f32 %v113, %v814
    %816 = vmatprep.subr.mxu0 %v815
    %v817 = vand.u32 %v112, 4294901760
    %v818 = vsub.f32 %v112, %v817
    %819 = vmatpush1.msra.mxu0 %v818
    %v820 = vand.u32 %v117, 4294901760
    %v821 = vsub.f32 %v117, %v820
    %822 = vmatprep.subr.mxu0 %v821
    %v823 = vand.u32 %v116, 4294901760
    %v824 = vsub.f32 %v116, %v823
    %825 = vmatpush1.msra.mxu0 %v824
    %v826 = vand.u32 %v121, 4294901760
    %v827 = vsub.f32 %v121, %v826
    %828 = vmatprep.subr.mxu0 %v827
    %v829 = vand.u32 %v120, 4294901760
    %v830 = vsub.f32 %v120, %v829
    %831 = vmatpush1.msra.mxu0 %v830
    %v832 = vand.u32 %v125, 4294901760
    %v833 = vsub.f32 %v125, %v832
    %834 = vmatprep.subr.mxu0 %v833
    %v835 = vand.u32 %v124, 4294901760
    %v836 = vsub.f32 %v124, %v835
    %837 = vmatpush1.msra.mxu0 %v836
    %v838 = vand.u32 %v129, 4294901760
    %v839 = vsub.f32 %v129, %v838
    %840 = vmatprep.subr.mxu0 %v839
    %v841 = vand.u32 %v128, 4294901760
    %v842 = vsub.f32 %v128, %v841
    %843 = vmatpush1.msra.mxu0 %v842
    %v844 = vand.u32 %v133, 4294901760
    %v845 = vsub.f32 %v133, %v844
    %846 = vmatprep.subr.mxu0 %v845
    %v847 = vand.u32 %v132, 4294901760
    %v848 = vsub.f32 %v132, %v847
    %849 = vmatpush1.msra.mxu0 %v848
    %v850 = vand.u32 %v137, 4294901760
    %v851 = vsub.f32 %v137, %v850
    %852 = vmatprep.subr.mxu0 %v851
    %v853 = vand.u32 %v136, 4294901760
    %v854 = vsub.f32 %v136, %v853
    %855 = vmatpush1.msra.mxu0 %v854
    %v856 = vand.u32 %v141, 4294901760
    %v857 = vsub.f32 %v141, %v856
    %858 = vmatprep.subr.mxu0 %v857
    %v859 = vand.u32 %v140, 4294901760
    %v860 = vsub.f32 %v140, %v859
    %861 = vmatpush1.msra.mxu0 %v860
    %v862 = vand.u32 %v145, 4294901760
    %v863 = vsub.f32 %v145, %v862
    %864 = vmatprep.subr.mxu0 %v863
    %v865 = vand.u32 %v144, 4294901760
    %v866 = vsub.f32 %v144, %v865
    %867 = vmatpush1.msra.mxu0 %v866
    %v868 = vand.u32 %v149, 4294901760
    %v869 = vsub.f32 %v149, %v868
    %870 = vmatprep.subr.mxu0 %v869
    %v871 = vand.u32 %v148, 4294901760
    %v872 = vsub.f32 %v148, %v871
    %873 = vmatpush1.msra.mxu0 %v872
    %v874 = vand.u32 %v153, 4294901760
    %v875 = vsub.f32 %v153, %v874
    %876 = vmatprep.subr.mxu0 %v875
    %v877 = vand.u32 %v152, 4294901760
    %v878 = vsub.f32 %v152, %v877
    %879 = vmatpush1.msra.mxu0 %v878
    %v880 = vand.u32 %v157, 4294901760
    %v881 = vsub.f32 %v157, %v880
    %882 = vmatprep.subr.mxu0 %v881
    %v883 = vand.u32 %v156, 4294901760
    %v884 = vsub.f32 %v156, %v883
    %885 = vmatpush1.msra.mxu0 %v884
    %v886 = vand.u32 %v161, 4294901760
    %v887 = vsub.f32 %v161, %v886
    %888 = vmatprep.subr.mxu0 %v887
    %v889 = vand.u32 %v160, 4294901760
    %v890 = vsub.f32 %v160, %v889
    %891 = vmatpush1.msra.mxu0 %v890
    %v892 = vand.u32 %v165, 4294901760
    %v893 = vsub.f32 %v165, %v892
    %894 = vmatprep.subr.mxu0 %v893
    %v895 = vand.u32 %v164, 4294901760
    %v896 = vsub.f32 %v164, %v895
    %897 = vmatpush1.msra.mxu0 %v896
    %v898 = vand.u32 %v39, 4294901760
    %v899 = vsub.f32 %v39, %v898
    %900 = vmatprep.mubr.f32.mxu0 %v899
    %v901 = vand.u32 %v38, 4294901760
    %v902 = vsub.f32 %v38, %v901
    %903 = vmatmul.mubr.f32.gmra.mrb[0].mxu0 %v902
    %v904 = vpop.f32.mrb[0].mxu0
    %v905 = vadd.f32 %v702, %v904
    %v906 = vpop.f32.mrb[0].mxu0
    %v907 = vadd.f32 %v704, %v906
    %908 = vdwg.mxu0
    %v909 = vand.u32 %v41, 4294901760
    %910 = vmatprep.subr.mxu0 %v909
    %v911 = vand.u32 %v40, 4294901760
    %912 = vmatpush1.msra.mxu0 %v911
    %v913 = vand.u32 %v45, 4294901760
    %914 = vmatprep.subr.mxu0 %v913
    %v915 = vand.u32 %v44, 4294901760
    %916 = vmatpush1.msra.mxu0 %v915
    %v917 = vand.u32 %v49, 4294901760
    %918 = vmatprep.subr.mxu0 %v917
    %v919 = vand.u32 %v48, 4294901760
    %920 = vmatpush1.msra.mxu0 %v919
    %v921 = vand.u32 %v53, 4294901760
    %922 = vmatprep.subr.mxu0 %v921
    %v923 = vand.u32 %v52, 4294901760
    %924 = vmatpush1.msra.mxu0 %v923
    %v925 = vand.u32 %v57, 4294901760
    %926 = vmatprep.subr.mxu0 %v925
    %v927 = vand.u32 %v56, 4294901760
    %928 = vmatpush1.msra.mxu0 %v927
    %v929 = vand.u32 %v61, 4294901760
    %930 = vmatprep.subr.mxu0 %v929
    %v931 = vand.u32 %v60, 4294901760
    %932 = vmatpush1.msra.mxu0 %v931
    %v933 = vand.u32 %v65, 4294901760
    %934 = vmatprep.subr.mxu0 %v933
    %v935 = vand.u32 %v64, 4294901760
    %936 = vmatpush1.msra.mxu0 %v935
    %v937 = vand.u32 %v69, 4294901760
    %938 = vmatprep.subr.mxu0 %v937
    %v939 = vand.u32 %v68, 4294901760
    %940 = vmatpush1.msra.mxu0 %v939
    %v941 = vand.u32 %v73, 4294901760
    %942 = vmatprep.subr.mxu0 %v941
    %v943 = vand.u32 %v72, 4294901760
    %944 = vmatpush1.msra.mxu0 %v943
    %v945 = vand.u32 %v77, 4294901760
    %946 = vmatprep.subr.mxu0 %v945
    %v947 = vand.u32 %v76, 4294901760
    %948 = vmatpush1.msra.mxu0 %v947
    %v949 = vand.u32 %v81, 4294901760
    %950 = vmatprep.subr.mxu0 %v949
    %v951 = vand.u32 %v80, 4294901760
    %952 = vmatpush1.msra.mxu0 %v951
    %v953 = vand.u32 %v85, 4294901760
    %954 = vmatprep.subr.mxu0 %v953
    %v955 = vand.u32 %v84, 4294901760
    %956 = vmatpush1.msra.mxu0 %v955
    %v957 = vand.u32 %v89, 4294901760
    %958 = vmatprep.subr.mxu0 %v957
    %v959 = vand.u32 %v88, 4294901760
    %960 = vmatpush1.msra.mxu0 %v959
    %v961 = vand.u32 %v93, 4294901760
    %962 = vmatprep.subr.mxu0 %v961
    %v963 = vand.u32 %v92, 4294901760
    %964 = vmatpush1.msra.mxu0 %v963
    %v965 = vand.u32 %v97, 4294901760
    %966 = vmatprep.subr.mxu0 %v965
    %v967 = vand.u32 %v96, 4294901760
    %968 = vmatpush1.msra.mxu0 %v967
    %v969 = vand.u32 %v101, 4294901760
    %970 = vmatprep.subr.mxu0 %v969
    %v971 = vand.u32 %v100, 4294901760
    %972 = vmatpush1.msra.mxu0 %v971
    %v973 = vand.u32 %v105, 4294901760
    %974 = vmatprep.subr.mxu0 %v973
    %v975 = vand.u32 %v104, 4294901760
    %976 = vmatpush1.msra.mxu0 %v975
    %v977 = vand.u32 %v109, 4294901760
    %978 = vmatprep.subr.mxu0 %v977
    %v979 = vand.u32 %v108, 4294901760
    %980 = vmatpush1.msra.mxu0 %v979
    %v981 = vand.u32 %v113, 4294901760
    %982 = vmatprep.subr.mxu0 %v981
    %v983 = vand.u32 %v112, 4294901760
    %984 = vmatpush1.msra.mxu0 %v983
    %v985 = vand.u32 %v117, 4294901760
    %986 = vmatprep.subr.mxu0 %v985
    %v987 = vand.u32 %v116, 4294901760
    %988 = vmatpush1.msra.mxu0 %v987
    %v989 = vand.u32 %v121, 4294901760
    %990 = vmatprep.subr.mxu0 %v989
    %v991 = vand.u32 %v120, 4294901760
    %992 = vmatpush1.msra.mxu0 %v991
    %v993 = vand.u32 %v125, 4294901760
    %994 = vmatprep.subr.mxu0 %v993
    %v995 = vand.u32 %v124, 4294901760
    %996 = vmatpush1.msra.mxu0 %v995
    %v997 = vand.u32 %v129, 4294901760
    %998 = vmatprep.subr.mxu0 %v997
    %v999 = vand.u32 %v128, 4294901760
    %1000 = vmatpush1.msra.mxu0 %v999
    %v1001 = vand.u32 %v133, 4294901760
    %1002 = vmatprep.subr.mxu0 %v1001
    %v1003 = vand.u32 %v132, 4294901760
    %1004 = vmatpush1.msra.mxu0 %v1003
    %v1005 = vand.u32 %v137, 4294901760
    %1006 = vmatprep.subr.mxu0 %v1005
    %v1007 = vand.u32 %v136, 4294901760
    %1008 = vmatpush1.msra.mxu0 %v1007
    %v1009 = vand.u32 %v141, 4294901760
    %1010 = vmatprep.subr.mxu0 %v1009
    %v1011 = vand.u32 %v140, 4294901760
    %1012 = vmatpush1.msra.mxu0 %v1011
    %v1013 = vand.u32 %v145, 4294901760
    %1014 = vmatprep.subr.mxu0 %v1013
    %v1015 = vand.u32 %v144, 4294901760
    %1016 = vmatpush1.msra.mxu0 %v1015
    %v1017 = vand.u32 %v149, 4294901760
    %1018 = vmatprep.subr.mxu0 %v1017
    %v1019 = vand.u32 %v148, 4294901760
    %1020 = vmatpush1.msra.mxu0 %v1019
    %v1021 = vand.u32 %v153, 4294901760
    %1022 = vmatprep.subr.mxu0 %v1021
    %v1023 = vand.u32 %v152, 4294901760
    %1024 = vmatpush1.msra.mxu0 %v1023
    %v1025 = vand.u32 %v157, 4294901760
    %1026 = vmatprep.subr.mxu0 %v1025
    %v1027 = vand.u32 %v156, 4294901760
    %1028 = vmatpush1.msra.mxu0 %v1027
    %v1029 = vand.u32 %v161, 4294901760
    %1030 = vmatprep.subr.mxu0 %v1029
    %v1031 = vand.u32 %v160, 4294901760
    %1032 = vmatpush1.msra.mxu0 %v1031
    %v1033 = vand.u32 %v165, 4294901760
    %1034 = vmatprep.subr.mxu0 %v1033
    %v1035 = vand.u32 %v164, 4294901760
    %1036 = vmatpush1.msra.mxu0 %v1035
    %v1037 = vand.u32 %v39, 4294901760
    %v1038 = vsub.f32 %v39, %v1037
    %v1039 = vand.u32 %v1038, 4294901760
    %1040 = vmatprep.mubr.f32.mxu0 %v1039
    %v1041 = vand.u32 %v38, 4294901760
    %v1042 = vsub.f32 %v38, %v1041
    %v1043 = vand.u32 %v1042, 4294901760
    %1044 = vmatmul.mubr.f32.gmra.mrb[0].mxu0 %v1043
    %v1045 = vpop.f32.mrb[0].mxu0
    %v1046 = vadd.f32 %v905, %v1045
    %v1047 = vpop.f32.mrb[0].mxu0
    %v1048 = vadd.f32 %v907, %v1047
    %1049 = vdwg.mxu0
    %v1050 = vand.u32 %v41, 4294901760
    %v1051 = vsub.f32 %v41, %v1050
    %v1052 = vand.u32 %v1051, 4294901760
    %1053 = vmatprep.subr.mxu0 %v1052
    %v1054 = vand.u32 %v40, 4294901760
    %v1055 = vsub.f32 %v40, %v1054
    %v1056 = vand.u32 %v1055, 4294901760
    %1057 = vmatpush1.msra.mxu0 %v1056
    %v1058 = vand.u32 %v45, 4294901760
    %v1059 = vsub.f32 %v45, %v1058
    %v1060 = vand.u32 %v1059, 4294901760
    %1061 = vmatprep.subr.mxu0 %v1060
    %v1062 = vand.u32 %v44, 4294901760
    %v1063 = vsub.f32 %v44, %v1062
    %v1064 = vand.u32 %v1063, 4294901760
    %1065 = vmatpush1.msra.mxu0 %v1064
    %v1066 = vand.u32 %v49, 4294901760
    %v1067 = vsub.f32 %v49, %v1066
    %v1068 = vand.u32 %v1067, 4294901760
    %1069 = vmatprep.subr.mxu0 %v1068
    %v1070 = vand.u32 %v48, 4294901760
    %v1071 = vsub.f32 %v48, %v1070
    %v1072 = vand.u32 %v1071, 4294901760
    %1073 = vmatpush1.msra.mxu0 %v1072
    %v1074 = vand.u32 %v53, 4294901760
    %v1075 = vsub.f32 %v53, %v1074
    %v1076 = vand.u32 %v1075, 4294901760
    %1077 = vmatprep.subr.mxu0 %v1076
    %v1078 = vand.u32 %v52, 4294901760
    %v1079 = vsub.f32 %v52, %v1078
    %v1080 = vand.u32 %v1079, 4294901760
    %1081 = vmatpush1.msra.mxu0 %v1080
    %v1082 = vand.u32 %v57, 4294901760
    %v1083 = vsub.f32 %v57, %v1082
    %v1084 = vand.u32 %v1083, 4294901760
    %1085 = vmatprep.subr.mxu0 %v1084
    %v1086 = vand.u32 %v56, 4294901760
    %v1087 = vsub.f32 %v56, %v1086
    %v1088 = vand.u32 %v1087, 4294901760
    %1089 = vmatpush1.msra.mxu0 %v1088
    %v1090 = vand.u32 %v61, 4294901760
    %v1091 = vsub.f32 %v61, %v1090
    %v1092 = vand.u32 %v1091, 4294901760
    %1093 = vmatprep.subr.mxu0 %v1092
    %v1094 = vand.u32 %v60, 4294901760
    %v1095 = vsub.f32 %v60, %v1094
    %v1096 = vand.u32 %v1095, 4294901760
    %1097 = vmatpush1.msra.mxu0 %v1096
    %v1098 = vand.u32 %v65, 4294901760
    %v1099 = vsub.f32 %v65, %v1098
    %v1100 = vand.u32 %v1099, 4294901760
    %1101 = vmatprep.subr.mxu0 %v1100
    %v1102 = vand.u32 %v64, 4294901760
    %v1103 = vsub.f32 %v64, %v1102
    %v1104 = vand.u32 %v1103, 4294901760
    %1105 = vmatpush1.msra.mxu0 %v1104
    %v1106 = vand.u32 %v69, 4294901760
    %v1107 = vsub.f32 %v69, %v1106
    %v1108 = vand.u32 %v1107, 4294901760
    %1109 = vmatprep.subr.mxu0 %v1108
    %v1110 = vand.u32 %v68, 4294901760
    %v1111 = vsub.f32 %v68, %v1110
    %v1112 = vand.u32 %v1111, 4294901760
    %1113 = vmatpush1.msra.mxu0 %v1112
    %v1114 = vand.u32 %v73, 4294901760
    %v1115 = vsub.f32 %v73, %v1114
    %v1116 = vand.u32 %v1115, 4294901760
    %1117 = vmatprep.subr.mxu0 %v1116
    %v1118 = vand.u32 %v72, 4294901760
    %v1119 = vsub.f32 %v72, %v1118
    %v1120 = vand.u32 %v1119, 4294901760
    %1121 = vmatpush1.msra.mxu0 %v1120
    %v1122 = vand.u32 %v77, 4294901760
    %v1123 = vsub.f32 %v77, %v1122
    %v1124 = vand.u32 %v1123, 4294901760
    %1125 = vmatprep.subr.mxu0 %v1124
    %v1126 = vand.u32 %v76, 4294901760
    %v1127 = vsub.f32 %v76, %v1126
    %v1128 = vand.u32 %v1127, 4294901760
    %1129 = vmatpush1.msra.mxu0 %v1128
    %v1130 = vand.u32 %v81, 4294901760
    %v1131 = vsub.f32 %v81, %v1130
    %v1132 = vand.u32 %v1131, 4294901760
    %1133 = vmatprep.subr.mxu0 %v1132
    %v1134 = vand.u32 %v80, 4294901760
    %v1135 = vsub.f32 %v80, %v1134
    %v1136 = vand.u32 %v1135, 4294901760
    %1137 = vmatpush1.msra.mxu0 %v1136
    %v1138 = vand.u32 %v85, 4294901760
    %v1139 = vsub.f32 %v85, %v1138
    %v1140 = vand.u32 %v1139, 4294901760
    %1141 = vmatprep.subr.mxu0 %v1140
    %v1142 = vand.u32 %v84, 4294901760
    %v1143 = vsub.f32 %v84, %v1142
    %v1144 = vand.u32 %v1143, 4294901760
    %1145 = vmatpush1.msra.mxu0 %v1144
    %v1146 = vand.u32 %v89, 4294901760
    %v1147 = vsub.f32 %v89, %v1146
    %v1148 = vand.u32 %v1147, 4294901760
    %1149 = vmatprep.subr.mxu0 %v1148
    %v1150 = vand.u32 %v88, 4294901760
    %v1151 = vsub.f32 %v88, %v1150
    %v1152 = vand.u32 %v1151, 4294901760
    %1153 = vmatpush1.msra.mxu0 %v1152
    %v1154 = vand.u32 %v93, 4294901760
    %v1155 = vsub.f32 %v93, %v1154
    %v1156 = vand.u32 %v1155, 4294901760
    %1157 = vmatprep.subr.mxu0 %v1156
    %v1158 = vand.u32 %v92, 4294901760
    %v1159 = vsub.f32 %v92, %v1158
    %v1160 = vand.u32 %v1159, 4294901760
    %1161 = vmatpush1.msra.mxu0 %v1160
    %v1162 = vand.u32 %v97, 4294901760
    %v1163 = vsub.f32 %v97, %v1162
    %v1164 = vand.u32 %v1163, 4294901760
    %1165 = vmatprep.subr.mxu0 %v1164
    %v1166 = vand.u32 %v96, 4294901760
    %v1167 = vsub.f32 %v96, %v1166
    %v1168 = vand.u32 %v1167, 4294901760
    %1169 = vmatpush1.msra.mxu0 %v1168
    %v1170 = vand.u32 %v101, 4294901760
    %v1171 = vsub.f32 %v101, %v1170
    %v1172 = vand.u32 %v1171, 4294901760
    %1173 = vmatprep.subr.mxu0 %v1172
    %v1174 = vand.u32 %v100, 4294901760
    %v1175 = vsub.f32 %v100, %v1174
    %v1176 = vand.u32 %v1175, 4294901760
    %1177 = vmatpush1.msra.mxu0 %v1176
    %v1178 = vand.u32 %v105, 4294901760
    %v1179 = vsub.f32 %v105, %v1178
    %v1180 = vand.u32 %v1179, 4294901760
    %1181 = vmatprep.subr.mxu0 %v1180
    %v1182 = vand.u32 %v104, 4294901760
    %v1183 = vsub.f32 %v104, %v1182
    %v1184 = vand.u32 %v1183, 4294901760
    %1185 = vmatpush1.msra.mxu0 %v1184
    %v1186 = vand.u32 %v109, 4294901760
    %v1187 = vsub.f32 %v109, %v1186
    %v1188 = vand.u32 %v1187, 4294901760
    %1189 = vmatprep.subr.mxu0 %v1188
    %v1190 = vand.u32 %v108, 4294901760
    %v1191 = vsub.f32 %v108, %v1190
    %v1192 = vand.u32 %v1191, 4294901760
    %1193 = vmatpush1.msra.mxu0 %v1192
    %v1194 = vand.u32 %v113, 4294901760
    %v1195 = vsub.f32 %v113, %v1194
    %v1196 = vand.u32 %v1195, 4294901760
    %1197 = vmatprep.subr.mxu0 %v1196
    %v1198 = vand.u32 %v112, 4294901760
    %v1199 = vsub.f32 %v112, %v1198
    %v1200 = vand.u32 %v1199, 4294901760
    %1201 = vmatpush1.msra.mxu0 %v1200
    %v1202 = vand.u32 %v117, 4294901760
    %v1203 = vsub.f32 %v117, %v1202
    %v1204 = vand.u32 %v1203, 4294901760
    %1205 = vmatprep.subr.mxu0 %v1204
    %v1206 = vand.u32 %v116, 4294901760
    %v1207 = vsub.f32 %v116, %v1206
    %v1208 = vand.u32 %v1207, 4294901760
    %1209 = vmatpush1.msra.mxu0 %v1208
    %v1210 = vand.u32 %v121, 4294901760
    %v1211 = vsub.f32 %v121, %v1210
    %v1212 = vand.u32 %v1211, 4294901760
    %1213 = vmatprep.subr.mxu0 %v1212
    %v1214 = vand.u32 %v120, 4294901760
    %v1215 = vsub.f32 %v120, %v1214
    %v1216 = vand.u32 %v1215, 4294901760
    %1217 = vmatpush1.msra.mxu0 %v1216
    %v1218 = vand.u32 %v125, 4294901760
    %v1219 = vsub.f32 %v125, %v1218
    %v1220 = vand.u32 %v1219, 4294901760
    %1221 = vmatprep.subr.mxu0 %v1220
    %v1222 = vand.u32 %v124, 4294901760
    %v1223 = vsub.f32 %v124, %v1222
    %v1224 = vand.u32 %v1223, 4294901760
    %1225 = vmatpush1.msra.mxu0 %v1224
    %v1226 = vand.u32 %v129, 4294901760
    %v1227 = vsub.f32 %v129, %v1226
    %v1228 = vand.u32 %v1227, 4294901760
    %1229 = vmatprep.subr.mxu0 %v1228
    %v1230 = vand.u32 %v128, 4294901760
    %v1231 = vsub.f32 %v128, %v1230
    %v1232 = vand.u32 %v1231, 4294901760
    %1233 = vmatpush1.msra.mxu0 %v1232
    %v1234 = vand.u32 %v133, 4294901760
    %v1235 = vsub.f32 %v133, %v1234
    %v1236 = vand.u32 %v1235, 4294901760
    %1237 = vmatprep.subr.mxu0 %v1236
    %v1238 = vand.u32 %v132, 4294901760
    %v1239 = vsub.f32 %v132, %v1238
    %v1240 = vand.u32 %v1239, 4294901760
    %1241 = vmatpush1.msra.mxu0 %v1240
    %v1242 = vand.u32 %v137, 4294901760
    %v1243 = vsub.f32 %v137, %v1242
    %v1244 = vand.u32 %v1243, 4294901760
    %1245 = vmatprep.subr.mxu0 %v1244
    %v1246 = vand.u32 %v136, 4294901760
    %v1247 = vsub.f32 %v136, %v1246
    %v1248 = vand.u32 %v1247, 4294901760
    %1249 = vmatpush1.msra.mxu0 %v1248
    %v1250 = vand.u32 %v141, 4294901760
    %v1251 = vsub.f32 %v141, %v1250
    %v1252 = vand.u32 %v1251, 4294901760
    %1253 = vmatprep.subr.mxu0 %v1252
    %v1254 = vand.u32 %v140, 4294901760
    %v1255 = vsub.f32 %v140, %v1254
    %v1256 = vand.u32 %v1255, 4294901760
    %1257 = vmatpush1.msra.mxu0 %v1256
    %v1258 = vand.u32 %v145, 4294901760
    %v1259 = vsub.f32 %v145, %v1258
    %v1260 = vand.u32 %v1259, 4294901760
    %1261 = vmatprep.subr.mxu0 %v1260
    %v1262 = vand.u32 %v144, 4294901760
    %v1263 = vsub.f32 %v144, %v1262
    %v1264 = vand.u32 %v1263, 4294901760
    %1265 = vmatpush1.msra.mxu0 %v1264
    %v1266 = vand.u32 %v149, 4294901760
    %v1267 = vsub.f32 %v149, %v1266
    %v1268 = vand.u32 %v1267, 4294901760
    %1269 = vmatprep.subr.mxu0 %v1268
    %v1270 = vand.u32 %v148, 4294901760
    %v1271 = vsub.f32 %v148, %v1270
    %v1272 = vand.u32 %v1271, 4294901760
    %1273 = vmatpush1.msra.mxu0 %v1272
    %v1274 = vand.u32 %v153, 4294901760
    %v1275 = vsub.f32 %v153, %v1274
    %v1276 = vand.u32 %v1275, 4294901760
    %1277 = vmatprep.subr.mxu0 %v1276
    %v1278 = vand.u32 %v152, 4294901760
    %v1279 = vsub.f32 %v152, %v1278
    %v1280 = vand.u32 %v1279, 4294901760
    %1281 = vmatpush1.msra.mxu0 %v1280
    %v1282 = vand.u32 %v157, 4294901760
    %v1283 = vsub.f32 %v157, %v1282
    %v1284 = vand.u32 %v1283, 4294901760
    %1285 = vmatprep.subr.mxu0 %v1284
    %v1286 = vand.u32 %v156, 4294901760
    %v1287 = vsub.f32 %v156, %v1286
    %v1288 = vand.u32 %v1287, 4294901760
    %1289 = vmatpush1.msra.mxu0 %v1288
    %v1290 = vand.u32 %v161, 4294901760
    %v1291 = vsub.f32 %v161, %v1290
    %v1292 = vand.u32 %v1291, 4294901760
    %1293 = vmatprep.subr.mxu0 %v1292
    %v1294 = vand.u32 %v160, 4294901760
    %v1295 = vsub.f32 %v160, %v1294
    %v1296 = vand.u32 %v1295, 4294901760
    %1297 = vmatpush1.msra.mxu0 %v1296
    %v1298 = vand.u32 %v165, 4294901760
    %v1299 = vsub.f32 %v165, %v1298
    %v1300 = vand.u32 %v1299, 4294901760
    %1301 = vmatprep.subr.mxu0 %v1300
    %v1302 = vand.u32 %v164, 4294901760
    %v1303 = vsub.f32 %v164, %v1302
    %v1304 = vand.u32 %v1303, 4294901760
    %1305 = vmatpush1.msra.mxu0 %v1304
    %v1306 = vand.u32 %v39, 4294901760
    %1307 = vmatprep.mubr.f32.mxu0 %v1306
    %v1308 = vand.u32 %v38, 4294901760
    %1309 = vmatmul.mubr.f32.gmra.mrb[0].mxu0 %v1308
    %v1310 = vpop.f32.mrb[0].mxu0
    %v1311 = vadd.f32 %v1046, %v1310
    %v1312 = vpop.f32.mrb[0].mxu0
    %v1313 = vadd.f32 %v1048, %v1312
    %1314 = vdwg.mxu0
    %v1315 = vand.u32 %v41, 4294901760
    %1316 = vmatprep.subr.mxu0 %v1315
    %v1317 = vand.u32 %v40, 4294901760
    %1318 = vmatpush1.msra.mxu0 %v1317
    %v1319 = vand.u32 %v45, 4294901760
    %1320 = vmatprep.subr.mxu0 %v1319
    %v1321 = vand.u32 %v44, 4294901760
    %1322 = vmatpush1.msra.mxu0 %v1321
    %v1323 = vand.u32 %v49, 4294901760
    %1324 = vmatprep.subr.mxu0 %v1323
    %v1325 = vand.u32 %v48, 4294901760
    %1326 = vmatpush1.msra.mxu0 %v1325
    %v1327 = vand.u32 %v53, 4294901760
    %1328 = vmatprep.subr.mxu0 %v1327
    %v1329 = vand.u32 %v52, 4294901760
    %1330 = vmatpush1.msra.mxu0 %v1329
    %v1331 = vand.u32 %v57, 4294901760
    %1332 = vmatprep.subr.mxu0 %v1331
    %v1333 = vand.u32 %v56, 4294901760
    %1334 = vmatpush1.msra.mxu0 %v1333
    %v1335 = vand.u32 %v61, 4294901760
    %1336 = vmatprep.subr.mxu0 %v1335
    %v1337 = vand.u32 %v60, 4294901760
    %1338 = vmatpush1.msra.mxu0 %v1337
    %v1339 = vand.u32 %v65, 4294901760
    %1340 = vmatprep.subr.mxu0 %v1339
    %v1341 = vand.u32 %v64, 4294901760
    %1342 = vmatpush1.msra.mxu0 %v1341
    %v1343 = vand.u32 %v69, 4294901760
    %1344 = vmatprep.subr.mxu0 %v1343
    %v1345 = vand.u32 %v68, 4294901760
    %1346 = vmatpush1.msra.mxu0 %v1345
    %v1347 = vand.u32 %v73, 4294901760
    %1348 = vmatprep.subr.mxu0 %v1347
    %v1349 = vand.u32 %v72, 4294901760
    %1350 = vmatpush1.msra.mxu0 %v1349
    %v1351 = vand.u32 %v77, 4294901760
    %1352 = vmatprep.subr.mxu0 %v1351
    %v1353 = vand.u32 %v76, 4294901760
    %1354 = vmatpush1.msra.mxu0 %v1353
    %v1355 = vand.u32 %v81, 4294901760
    %1356 = vmatprep.subr.mxu0 %v1355
    %v1357 = vand.u32 %v80, 4294901760
    %1358 = vmatpush1.msra.mxu0 %v1357
    %v1359 = vand.u32 %v85, 4294901760
    %1360 = vmatprep.subr.mxu0 %v1359
    %v1361 = vand.u32 %v84, 4294901760
    %1362 = vmatpush1.msra.mxu0 %v1361
    %v1363 = vand.u32 %v89, 4294901760
    %1364 = vmatprep.subr.mxu0 %v1363
    %v1365 = vand.u32 %v88, 4294901760
    %1366 = vmatpush1.msra.mxu0 %v1365
    %v1367 = vand.u32 %v93, 4294901760
    %1368 = vmatprep.subr.mxu0 %v1367
    %v1369 = vand.u32 %v92, 4294901760
    %1370 = vmatpush1.msra.mxu0 %v1369
    %v1371 = vand.u32 %v97, 4294901760
    %1372 = vmatprep.subr.mxu0 %v1371
    %v1373 = vand.u32 %v96, 4294901760
    %1374 = vmatpush1.msra.mxu0 %v1373
    %v1375 = vand.u32 %v101, 4294901760
    %1376 = vmatprep.subr.mxu0 %v1375
    %v1377 = vand.u32 %v100, 4294901760
    %1378 = vmatpush1.msra.mxu0 %v1377
    %v1379 = vand.u32 %v105, 4294901760
    %1380 = vmatprep.subr.mxu0 %v1379
    %v1381 = vand.u32 %v104, 4294901760
    %1382 = vmatpush1.msra.mxu0 %v1381
    %v1383 = vand.u32 %v109, 4294901760
    %1384 = vmatprep.subr.mxu0 %v1383
    %v1385 = vand.u32 %v108, 4294901760
    %1386 = vmatpush1.msra.mxu0 %v1385
    %v1387 = vand.u32 %v113, 4294901760
    %1388 = vmatprep.subr.mxu0 %v1387
    %v1389 = vand.u32 %v112, 4294901760
    %1390 = vmatpush1.msra.mxu0 %v1389
    %v1391 = vand.u32 %v117, 4294901760
    %1392 = vmatprep.subr.mxu0 %v1391
    %v1393 = vand.u32 %v116, 4294901760
    %1394 = vmatpush1.msra.mxu0 %v1393
    %v1395 = vand.u32 %v121, 4294901760
    %1396 = vmatprep.subr.mxu0 %v1395
    %v1397 = vand.u32 %v120, 4294901760
    %1398 = vmatpush1.msra.mxu0 %v1397
    %v1399 = vand.u32 %v125, 4294901760
    %1400 = vmatprep.subr.mxu0 %v1399
    %v1401 = vand.u32 %v124, 4294901760
    %1402 = vmatpush1.msra.mxu0 %v1401
    %v1403 = vand.u32 %v129, 4294901760
    %1404 = vmatprep.subr.mxu0 %v1403
    %v1405 = vand.u32 %v128, 4294901760
    %1406 = vmatpush1.msra.mxu0 %v1405
    %v1407 = vand.u32 %v133, 4294901760
    %1408 = vmatprep.subr.mxu0 %v1407
    %v1409 = vand.u32 %v132, 4294901760
    %1410 = vmatpush1.msra.mxu0 %v1409
    %v1411 = vand.u32 %v137, 4294901760
    %1412 = vmatprep.subr.mxu0 %v1411
    %v1413 = vand.u32 %v136, 4294901760
    %1414 = vmatpush1.msra.mxu0 %v1413
    %v1415 = vand.u32 %v141, 4294901760
    %1416 = vmatprep.subr.mxu0 %v1415
    %v1417 = vand.u32 %v140, 4294901760
    %1418 = vmatpush1.msra.mxu0 %v1417
    %v1419 = vand.u32 %v145, 4294901760
    %1420 = vmatprep.subr.mxu0 %v1419
    %v1421 = vand.u32 %v144, 4294901760
    %1422 = vmatpush1.msra.mxu0 %v1421
    %v1423 = vand.u32 %v149, 4294901760
    %1424 = vmatprep.subr.mxu0 %v1423
    %v1425 = vand.u32 %v148, 4294901760
    %1426 = vmatpush1.msra.mxu0 %v1425
    %v1427 = vand.u32 %v153, 4294901760
    %1428 = vmatprep.subr.mxu0 %v1427
    %v1429 = vand.u32 %v152, 4294901760
    %1430 = vmatpush1.msra.mxu0 %v1429
    %v1431 = vand.u32 %v157, 4294901760
    %1432 = vmatprep.subr.mxu0 %v1431
    %v1433 = vand.u32 %v156, 4294901760
    %1434 = vmatpush1.msra.mxu0 %v1433
    %v1435 = vand.u32 %v161, 4294901760
    %1436 = vmatprep.subr.mxu0 %v1435
    %v1437 = vand.u32 %v160, 4294901760
    %1438 = vmatpush1.msra.mxu0 %v1437
    %v1439 = vand.u32 %v165, 4294901760
    %1440 = vmatprep.subr.mxu0 %v1439
    %v1441 = vand.u32 %v164, 4294901760
    %1442 = vmatpush1.msra.mxu0 %v1441
    %v1443 = vand.u32 %v39, 4294901760
    %1444 = vmatprep.mubr.f32.mxu0 %v1443
    %v1445 = vand.u32 %v38, 4294901760
    %1446 = vmatmul.mubr.f32.gmra.mrb[0].mxu0 %v1445
    %v1447 = vpop.f32.mrb[0].mxu0
    %v1448 = vadd.f32 %v1311, %v1447
    %v1449 = vpop.f32.mrb[0].mxu0
    %v1450 = vadd.f32 %v1313, %v1449
    %1451 = vdwg.mxu0
    %v1452 = vand.u32 %v43, 4294901760
    %1453 = vmatprep.subr.mxu0 %v1452
    %v1454 = vand.u32 %v42, 4294901760
    %1455 = vmatpush1.msra.mxu0 %v1454
    %v1456 = vand.u32 %v47, 4294901760
    %1457 = vmatprep.subr.mxu0 %v1456
    %v1458 = vand.u32 %v46, 4294901760
    %1459 = vmatpush1.msra.mxu0 %v1458
    %v1460 = vand.u32 %v51, 4294901760
    %1461 = vmatprep.subr.mxu0 %v1460
    %v1462 = vand.u32 %v50, 4294901760
    %1463 = vmatpush1.msra.mxu0 %v1462
    %v1464 = vand.u32 %v55, 4294901760
    %1465 = vmatprep.subr.mxu0 %v1464
    %v1466 = vand.u32 %v54, 4294901760
    %1467 = vmatpush1.msra.mxu0 %v1466
    %v1468 = vand.u32 %v59, 4294901760
    %1469 = vmatprep.subr.mxu0 %v1468
    %v1470 = vand.u32 %v58, 4294901760
    %1471 = vmatpush1.msra.mxu0 %v1470
    %v1472 = vand.u32 %v63, 4294901760
    %1473 = vmatprep.subr.mxu0 %v1472
    %v1474 = vand.u32 %v62, 4294901760
    %1475 = vmatpush1.msra.mxu0 %v1474
    %v1476 = vand.u32 %v67, 4294901760
    %1477 = vmatprep.subr.mxu0 %v1476
    %v1478 = vand.u32 %v66, 4294901760
    %1479 = vmatpush1.msra.mxu0 %v1478
    %v1480 = vand.u32 %v71, 4294901760
    %1481 = vmatprep.subr.mxu0 %v1480
    %v1482 = vand.u32 %v70, 4294901760
    %1483 = vmatpush1.msra.mxu0 %v1482
    %v1484 = vand.u32 %v75, 4294901760
    %1485 = vmatprep.subr.mxu0 %v1484
    %v1486 = vand.u32 %v74, 4294901760
    %1487 = vmatpush1.msra.mxu0 %v1486
    %v1488 = vand.u32 %v79, 4294901760
    %1489 = vmatprep.subr.mxu0 %v1488
    %v1490 = vand.u32 %v78, 4294901760
    %1491 = vmatpush1.msra.mxu0 %v1490
    %v1492 = vand.u32 %v83, 4294901760
    %1493 = vmatprep.subr.mxu0 %v1492
    %v1494 = vand.u32 %v82, 4294901760
    %1495 = vmatpush1.msra.mxu0 %v1494
    %v1496 = vand.u32 %v87, 4294901760
    %1497 = vmatprep.subr.mxu0 %v1496
    %v1498 = vand.u32 %v86, 4294901760
    %1499 = vmatpush1.msra.mxu0 %v1498
    %v1500 = vand.u32 %v91, 4294901760
    %1501 = vmatprep.subr.mxu0 %v1500
    %v1502 = vand.u32 %v90, 4294901760
    %1503 = vmatpush1.msra.mxu0 %v1502
    %v1504 = vand.u32 %v95, 4294901760
    %1505 = vmatprep.subr.mxu0 %v1504
    %v1506 = vand.u32 %v94, 4294901760
    %1507 = vmatpush1.msra.mxu0 %v1506
    %v1508 = vand.u32 %v99, 4294901760
    %1509 = vmatprep.subr.mxu0 %v1508
    %v1510 = vand.u32 %v98, 4294901760
    %1511 = vmatpush1.msra.mxu0 %v1510
    %v1512 = vand.u32 %v103, 4294901760
    %1513 = vmatprep.subr.mxu0 %v1512
    %v1514 = vand.u32 %v102, 4294901760
    %1515 = vmatpush1.msra.mxu0 %v1514
    %v1516 = vand.u32 %v107, 4294901760
    %1517 = vmatprep.subr.mxu0 %v1516
    %v1518 = vand.u32 %v106, 4294901760
    %1519 = vmatpush1.msra.mxu0 %v1518
    %v1520 = vand.u32 %v111, 4294901760
    %1521 = vmatprep.subr.mxu0 %v1520
    %v1522 = vand.u32 %v110, 4294901760
    %1523 = vmatpush1.msra.mxu0 %v1522
    %v1524 = vand.u32 %v115, 4294901760
    %1525 = vmatprep.subr.mxu0 %v1524
    %v1526 = vand.u32 %v114, 4294901760
    %1527 = vmatpush1.msra.mxu0 %v1526
    %v1528 = vand.u32 %v119, 4294901760
    %1529 = vmatprep.subr.mxu0 %v1528
    %v1530 = vand.u32 %v118, 4294901760
    %1531 = vmatpush1.msra.mxu0 %v1530
    %v1532 = vand.u32 %v123, 4294901760
    %1533 = vmatprep.subr.mxu0 %v1532
    %v1534 = vand.u32 %v122, 4294901760
    %1535 = vmatpush1.msra.mxu0 %v1534
    %v1536 = vand.u32 %v127, 4294901760
    %1537 = vmatprep.subr.mxu0 %v1536
    %v1538 = vand.u32 %v126, 4294901760
    %1539 = vmatpush1.msra.mxu0 %v1538
    %v1540 = vand.u32 %v131, 4294901760
    %1541 = vmatprep.subr.mxu0 %v1540
    %v1542 = vand.u32 %v130, 4294901760
    %1543 = vmatpush1.msra.mxu0 %v1542
    %v1544 = vand.u32 %v135, 4294901760
    %1545 = vmatprep.subr.mxu0 %v1544
    %v1546 = vand.u32 %v134, 4294901760
    %1547 = vmatpush1.msra.mxu0 %v1546
    %v1548 = vand.u32 %v139, 4294901760
    %1549 = vmatprep.subr.mxu0 %v1548
    %v1550 = vand.u32 %v138, 4294901760
    %1551 = vmatpush1.msra.mxu0 %v1550
    %v1552 = vand.u32 %v143, 4294901760
    %1553 = vmatprep.subr.mxu0 %v1552
    %v1554 = vand.u32 %v142, 4294901760
    %1555 = vmatpush1.msra.mxu0 %v1554
    %v1556 = vand.u32 %v147, 4294901760
    %1557 = vmatprep.subr.mxu0 %v1556
    %v1558 = vand.u32 %v146, 4294901760
    %1559 = vmatpush1.msra.mxu0 %v1558
    %v1560 = vand.u32 %v151, 4294901760
    %1561 = vmatprep.subr.mxu0 %v1560
    %v1562 = vand.u32 %v150, 4294901760
    %1563 = vmatpush1.msra.mxu0 %v1562
    %v1564 = vand.u32 %v155, 4294901760
    %1565 = vmatprep.subr.mxu0 %v1564
    %v1566 = vand.u32 %v154, 4294901760
    %1567 = vmatpush1.msra.mxu0 %v1566
    %v1568 = vand.u32 %v159, 4294901760
    %1569 = vmatprep.subr.mxu0 %v1568
    %v1570 = vand.u32 %v158, 4294901760
    %1571 = vmatpush1.msra.mxu0 %v1570
    %v1572 = vand.u32 %v163, 4294901760
    %1573 = vmatprep.subr.mxu0 %v1572
    %v1574 = vand.u32 %v162, 4294901760
    %1575 = vmatpush1.msra.mxu0 %v1574
    %v1576 = vand.u32 %v167, 4294901760
    %1577 = vmatprep.subr.mxu0 %v1576
    %v1578 = vand.u32 %v166, 4294901760
    %1579 = vmatpush1.msra.mxu0 %v1578
    %v1580 = vand.u32 %v39, 4294901760
    %v1581 = vsub.f32 %v39, %v1580
    %v1582 = vand.u32 %v1581, 4294901760
    %v1583 = vsub.f32 %v1581, %v1582
    %v1584 = vand.u32 %v1583, 4294901760
    %1585 = vmatprep.mubr.f32.mxu0 %v1584
    %v1586 = vand.u32 %v38, 4294901760
    %v1587 = vsub.f32 %v38, %v1586
    %v1588 = vand.u32 %v1587, 4294901760
    %v1589 = vsub.f32 %v1587, %v1588
    %v1590 = vand.u32 %v1589, 4294901760
    %1591 = vmatmul.mubr.f32.gmra.mrb[0].mxu0 %v1590
    %v1592 = vpop.f32.mrb[0].mxu0
    %v1593 = vadd.f32 0.0, %v1592
    %v1594 = vpop.f32.mrb[0].mxu0
    %v1595 = vadd.f32 0.0, %v1594
    %1596 = vdwg.mxu0
    %v1597 = vand.u32 %v43, 4294901760
    %v1598 = vsub.f32 %v43, %v1597
    %v1599 = vand.u32 %v1598, 4294901760
    %v1600 = vsub.f32 %v1598, %v1599
    %v1601 = vand.u32 %v1600, 4294901760
    %1602 = vmatprep.subr.mxu0 %v1601
    %v1603 = vand.u32 %v42, 4294901760
    %v1604 = vsub.f32 %v42, %v1603
    %v1605 = vand.u32 %v1604, 4294901760
    %v1606 = vsub.f32 %v1604, %v1605
    %v1607 = vand.u32 %v1606, 4294901760
    %1608 = vmatpush1.msra.mxu0 %v1607
    %v1609 = vand.u32 %v47, 4294901760
    %v1610 = vsub.f32 %v47, %v1609
    %v1611 = vand.u32 %v1610, 4294901760
    %v1612 = vsub.f32 %v1610, %v1611
    %v1613 = vand.u32 %v1612, 4294901760
    %1614 = vmatprep.subr.mxu0 %v1613
    %v1615 = vand.u32 %v46, 4294901760
    %v1616 = vsub.f32 %v46, %v1615
    %v1617 = vand.u32 %v1616, 4294901760
    %v1618 = vsub.f32 %v1616, %v1617
    %v1619 = vand.u32 %v1618, 4294901760
    %1620 = vmatpush1.msra.mxu0 %v1619
    %v1621 = vand.u32 %v51, 4294901760
    %v1622 = vsub.f32 %v51, %v1621
    %v1623 = vand.u32 %v1622, 4294901760
    %v1624 = vsub.f32 %v1622, %v1623
    %v1625 = vand.u32 %v1624, 4294901760
    %1626 = vmatprep.subr.mxu0 %v1625
    %v1627 = vand.u32 %v50, 4294901760
    %v1628 = vsub.f32 %v50, %v1627
    %v1629 = vand.u32 %v1628, 4294901760
    %v1630 = vsub.f32 %v1628, %v1629
    %v1631 = vand.u32 %v1630, 4294901760
    %1632 = vmatpush1.msra.mxu0 %v1631
    %v1633 = vand.u32 %v55, 4294901760
    %v1634 = vsub.f32 %v55, %v1633
    %v1635 = vand.u32 %v1634, 4294901760
    %v1636 = vsub.f32 %v1634, %v1635
    %v1637 = vand.u32 %v1636, 4294901760
    %1638 = vmatprep.subr.mxu0 %v1637
    %v1639 = vand.u32 %v54, 4294901760
    %v1640 = vsub.f32 %v54, %v1639
    %v1641 = vand.u32 %v1640, 4294901760
    %v1642 = vsub.f32 %v1640, %v1641
    %v1643 = vand.u32 %v1642, 4294901760
    %1644 = vmatpush1.msra.mxu0 %v1643
    %v1645 = vand.u32 %v59, 4294901760
    %v1646 = vsub.f32 %v59, %v1645
    %v1647 = vand.u32 %v1646, 4294901760
    %v1648 = vsub.f32 %v1646, %v1647
    %v1649 = vand.u32 %v1648, 4294901760
    %1650 = vmatprep.subr.mxu0 %v1649
    %v1651 = vand.u32 %v58, 4294901760
    %v1652 = vsub.f32 %v58, %v1651
    %v1653 = vand.u32 %v1652, 4294901760
    %v1654 = vsub.f32 %v1652, %v1653
    %v1655 = vand.u32 %v1654, 4294901760
    %1656 = vmatpush1.msra.mxu0 %v1655
    %v1657 = vand.u32 %v63, 4294901760
    %v1658 = vsub.f32 %v63, %v1657
    %v1659 = vand.u32 %v1658, 4294901760
    %v1660 = vsub.f32 %v1658, %v1659
    %v1661 = vand.u32 %v1660, 4294901760
    %1662 = vmatprep.subr.mxu0 %v1661
    %v1663 = vand.u32 %v62, 4294901760
    %v1664 = vsub.f32 %v62, %v1663
    %v1665 = vand.u32 %v1664, 4294901760
    %v1666 = vsub.f32 %v1664, %v1665
    %v1667 = vand.u32 %v1666, 4294901760
    %1668 = vmatpush1.msra.mxu0 %v1667
    %v1669 = vand.u32 %v67, 4294901760
    %v1670 = vsub.f32 %v67, %v1669
    %v1671 = vand.u32 %v1670, 4294901760
    %v1672 = vsub.f32 %v1670, %v1671
    %v1673 = vand.u32 %v1672, 4294901760
    %1674 = vmatprep.subr.mxu0 %v1673
    %v1675 = vand.u32 %v66, 4294901760
    %v1676 = vsub.f32 %v66, %v1675
    %v1677 = vand.u32 %v1676, 4294901760
    %v1678 = vsub.f32 %v1676, %v1677
    %v1679 = vand.u32 %v1678, 4294901760
    %1680 = vmatpush1.msra.mxu0 %v1679
    %v1681 = vand.u32 %v71, 4294901760
    %v1682 = vsub.f32 %v71, %v1681
    %v1683 = vand.u32 %v1682, 4294901760
    %v1684 = vsub.f32 %v1682, %v1683
    %v1685 = vand.u32 %v1684, 4294901760
    %1686 = vmatprep.subr.mxu0 %v1685
    %v1687 = vand.u32 %v70, 4294901760
    %v1688 = vsub.f32 %v70, %v1687
    %v1689 = vand.u32 %v1688, 4294901760
    %v1690 = vsub.f32 %v1688, %v1689
    %v1691 = vand.u32 %v1690, 4294901760
    %1692 = vmatpush1.msra.mxu0 %v1691
    %v1693 = vand.u32 %v75, 4294901760
    %v1694 = vsub.f32 %v75, %v1693
    %v1695 = vand.u32 %v1694, 4294901760
    %v1696 = vsub.f32 %v1694, %v1695
    %v1697 = vand.u32 %v1696, 4294901760
    %1698 = vmatprep.subr.mxu0 %v1697
    %v1699 = vand.u32 %v74, 4294901760
    %v1700 = vsub.f32 %v74, %v1699
    %v1701 = vand.u32 %v1700, 4294901760
    %v1702 = vsub.f32 %v1700, %v1701
    %v1703 = vand.u32 %v1702, 4294901760
    %1704 = vmatpush1.msra.mxu0 %v1703
    %v1705 = vand.u32 %v79, 4294901760
    %v1706 = vsub.f32 %v79, %v1705
    %v1707 = vand.u32 %v1706, 4294901760
    %v1708 = vsub.f32 %v1706, %v1707
    %v1709 = vand.u32 %v1708, 4294901760
    %1710 = vmatprep.subr.mxu0 %v1709
    %v1711 = vand.u32 %v78, 4294901760
    %v1712 = vsub.f32 %v78, %v1711
    %v1713 = vand.u32 %v1712, 4294901760
    %v1714 = vsub.f32 %v1712, %v1713
    %v1715 = vand.u32 %v1714, 4294901760
    %1716 = vmatpush1.msra.mxu0 %v1715
    %v1717 = vand.u32 %v83, 4294901760
    %v1718 = vsub.f32 %v83, %v1717
    %v1719 = vand.u32 %v1718, 4294901760
    %v1720 = vsub.f32 %v1718, %v1719
    %v1721 = vand.u32 %v1720, 4294901760
    %1722 = vmatprep.subr.mxu0 %v1721
    %v1723 = vand.u32 %v82, 4294901760
    %v1724 = vsub.f32 %v82, %v1723
    %v1725 = vand.u32 %v1724, 4294901760
    %v1726 = vsub.f32 %v1724, %v1725
    %v1727 = vand.u32 %v1726, 4294901760
    %1728 = vmatpush1.msra.mxu0 %v1727
    %v1729 = vand.u32 %v87, 4294901760
    %v1730 = vsub.f32 %v87, %v1729
    %v1731 = vand.u32 %v1730, 4294901760
    %v1732 = vsub.f32 %v1730, %v1731
    %v1733 = vand.u32 %v1732, 4294901760
    %1734 = vmatprep.subr.mxu0 %v1733
    %v1735 = vand.u32 %v86, 4294901760
    %v1736 = vsub.f32 %v86, %v1735
    %v1737 = vand.u32 %v1736, 4294901760
    %v1738 = vsub.f32 %v1736, %v1737
    %v1739 = vand.u32 %v1738, 4294901760
    %1740 = vmatpush1.msra.mxu0 %v1739
    %v1741 = vand.u32 %v91, 4294901760
    %v1742 = vsub.f32 %v91, %v1741
    %v1743 = vand.u32 %v1742, 4294901760
    %v1744 = vsub.f32 %v1742, %v1743
    %v1745 = vand.u32 %v1744, 4294901760
    %1746 = vmatprep.subr.mxu0 %v1745
    %v1747 = vand.u32 %v90, 4294901760
    %v1748 = vsub.f32 %v90, %v1747
    %v1749 = vand.u32 %v1748, 4294901760
    %v1750 = vsub.f32 %v1748, %v1749
    %v1751 = vand.u32 %v1750, 4294901760
    %1752 = vmatpush1.msra.mxu0 %v1751
    %v1753 = vand.u32 %v95, 4294901760
    %v1754 = vsub.f32 %v95, %v1753
    %v1755 = vand.u32 %v1754, 4294901760
    %v1756 = vsub.f32 %v1754, %v1755
    %v1757 = vand.u32 %v1756, 4294901760
    %1758 = vmatprep.subr.mxu0 %v1757
    %v1759 = vand.u32 %v94, 4294901760
    %v1760 = vsub.f32 %v94, %v1759
    %v1761 = vand.u32 %v1760, 4294901760
    %v1762 = vsub.f32 %v1760, %v1761
    %v1763 = vand.u32 %v1762, 4294901760
    %1764 = vmatpush1.msra.mxu0 %v1763
    %v1765 = vand.u32 %v99, 4294901760
    %v1766 = vsub.f32 %v99, %v1765
    %v1767 = vand.u32 %v1766, 4294901760
    %v1768 = vsub.f32 %v1766, %v1767
    %v1769 = vand.u32 %v1768, 4294901760
    %1770 = vmatprep.subr.mxu0 %v1769
    %v1771 = vand.u32 %v98, 4294901760
    %v1772 = vsub.f32 %v98, %v1771
    %v1773 = vand.u32 %v1772, 4294901760
    %v1774 = vsub.f32 %v1772, %v1773
    %v1775 = vand.u32 %v1774, 4294901760
    %1776 = vmatpush1.msra.mxu0 %v1775
    %v1777 = vand.u32 %v103, 4294901760
    %v1778 = vsub.f32 %v103, %v1777
    %v1779 = vand.u32 %v1778, 4294901760
    %v1780 = vsub.f32 %v1778, %v1779
    %v1781 = vand.u32 %v1780, 4294901760
    %1782 = vmatprep.subr.mxu0 %v1781
    %v1783 = vand.u32 %v102, 4294901760
    %v1784 = vsub.f32 %v102, %v1783
    %v1785 = vand.u32 %v1784, 4294901760
    %v1786 = vsub.f32 %v1784, %v1785
    %v1787 = vand.u32 %v1786, 4294901760
    %1788 = vmatpush1.msra.mxu0 %v1787
    %v1789 = vand.u32 %v107, 4294901760
    %v1790 = vsub.f32 %v107, %v1789
    %v1791 = vand.u32 %v1790, 4294901760
    %v1792 = vsub.f32 %v1790, %v1791
    %v1793 = vand.u32 %v1792, 4294901760
    %1794 = vmatprep.subr.mxu0 %v1793
    %v1795 = vand.u32 %v106, 4294901760
    %v1796 = vsub.f32 %v106, %v1795
    %v1797 = vand.u32 %v1796, 4294901760
    %v1798 = vsub.f32 %v1796, %v1797
    %v1799 = vand.u32 %v1798, 4294901760
    %1800 = vmatpush1.msra.mxu0 %v1799
    %v1801 = vand.u32 %v111, 4294901760
    %v1802 = vsub.f32 %v111, %v1801
    %v1803 = vand.u32 %v1802, 4294901760
    %v1804 = vsub.f32 %v1802, %v1803
    %v1805 = vand.u32 %v1804, 4294901760
    %1806 = vmatprep.subr.mxu0 %v1805
    %v1807 = vand.u32 %v110, 4294901760
    %v1808 = vsub.f32 %v110, %v1807
    %v1809 = vand.u32 %v1808, 4294901760
    %v1810 = vsub.f32 %v1808, %v1809
    %v1811 = vand.u32 %v1810, 4294901760
    %1812 = vmatpush1.msra.mxu0 %v1811
    %v1813 = vand.u32 %v115, 4294901760
    %v1814 = vsub.f32 %v115, %v1813
    %v1815 = vand.u32 %v1814, 4294901760
    %v1816 = vsub.f32 %v1814, %v1815
    %v1817 = vand.u32 %v1816, 4294901760
    %1818 = vmatprep.subr.mxu0 %v1817
    %v1819 = vand.u32 %v114, 4294901760
    %v1820 = vsub.f32 %v114, %v1819
    %v1821 = vand.u32 %v1820, 4294901760
    %v1822 = vsub.f32 %v1820, %v1821
    %v1823 = vand.u32 %v1822, 4294901760
    %1824 = vmatpush1.msra.mxu0 %v1823
    %v1825 = vand.u32 %v119, 4294901760
    %v1826 = vsub.f32 %v119, %v1825
    %v1827 = vand.u32 %v1826, 4294901760
    %v1828 = vsub.f32 %v1826, %v1827
    %v1829 = vand.u32 %v1828, 4294901760
    %1830 = vmatprep.subr.mxu0 %v1829
    %v1831 = vand.u32 %v118, 4294901760
    %v1832 = vsub.f32 %v118, %v1831
    %v1833 = vand.u32 %v1832, 4294901760
    %v1834 = vsub.f32 %v1832, %v1833
    %v1835 = vand.u32 %v1834, 4294901760
    %1836 = vmatpush1.msra.mxu0 %v1835
    %v1837 = vand.u32 %v123, 4294901760
    %v1838 = vsub.f32 %v123, %v1837
    %v1839 = vand.u32 %v1838, 4294901760
    %v1840 = vsub.f32 %v1838, %v1839
    %v1841 = vand.u32 %v1840, 4294901760
    %1842 = vmatprep.subr.mxu0 %v1841
    %v1843 = vand.u32 %v122, 4294901760
    %v1844 = vsub.f32 %v122, %v1843
    %v1845 = vand.u32 %v1844, 4294901760
    %v1846 = vsub.f32 %v1844, %v1845
    %v1847 = vand.u32 %v1846, 4294901760
    %1848 = vmatpush1.msra.mxu0 %v1847
    %v1849 = vand.u32 %v127, 4294901760
    %v1850 = vsub.f32 %v127, %v1849
    %v1851 = vand.u32 %v1850, 4294901760
    %v1852 = vsub.f32 %v1850, %v1851
    %v1853 = vand.u32 %v1852, 4294901760
    %1854 = vmatprep.subr.mxu0 %v1853
    %v1855 = vand.u32 %v126, 4294901760
    %v1856 = vsub.f32 %v126, %v1855
    %v1857 = vand.u32 %v1856, 4294901760
    %v1858 = vsub.f32 %v1856, %v1857
    %v1859 = vand.u32 %v1858, 4294901760
    %1860 = vmatpush1.msra.mxu0 %v1859
    %v1861 = vand.u32 %v131, 4294901760
    %v1862 = vsub.f32 %v131, %v1861
    %v1863 = vand.u32 %v1862, 4294901760
    %v1864 = vsub.f32 %v1862, %v1863
    %v1865 = vand.u32 %v1864, 4294901760
    %1866 = vmatprep.subr.mxu0 %v1865
    %v1867 = vand.u32 %v130, 4294901760
    %v1868 = vsub.f32 %v130, %v1867
    %v1869 = vand.u32 %v1868, 4294901760
    %v1870 = vsub.f32 %v1868, %v1869
    %v1871 = vand.u32 %v1870, 4294901760
    %1872 = vmatpush1.msra.mxu0 %v1871
    %v1873 = vand.u32 %v135, 4294901760
    %v1874 = vsub.f32 %v135, %v1873
    %v1875 = vand.u32 %v1874, 4294901760
    %v1876 = vsub.f32 %v1874, %v1875
    %v1877 = vand.u32 %v1876, 4294901760
    %1878 = vmatprep.subr.mxu0 %v1877
    %v1879 = vand.u32 %v134, 4294901760
    %v1880 = vsub.f32 %v134, %v1879
    %v1881 = vand.u32 %v1880, 4294901760
    %v1882 = vsub.f32 %v1880, %v1881
    %v1883 = vand.u32 %v1882, 4294901760
    %1884 = vmatpush1.msra.mxu0 %v1883
    %v1885 = vand.u32 %v139, 4294901760
    %v1886 = vsub.f32 %v139, %v1885
    %v1887 = vand.u32 %v1886, 4294901760
    %v1888 = vsub.f32 %v1886, %v1887
    %v1889 = vand.u32 %v1888, 4294901760
    %1890 = vmatprep.subr.mxu0 %v1889
    %v1891 = vand.u32 %v138, 4294901760
    %v1892 = vsub.f32 %v138, %v1891
    %v1893 = vand.u32 %v1892, 4294901760
    %v1894 = vsub.f32 %v1892, %v1893
    %v1895 = vand.u32 %v1894, 4294901760
    %1896 = vmatpush1.msra.mxu0 %v1895
    %v1897 = vand.u32 %v143, 4294901760
    %v1898 = vsub.f32 %v143, %v1897
    %v1899 = vand.u32 %v1898, 4294901760
    %v1900 = vsub.f32 %v1898, %v1899
    %v1901 = vand.u32 %v1900, 4294901760
    %1902 = vmatprep.subr.mxu0 %v1901
    %v1903 = vand.u32 %v142, 4294901760
    %v1904 = vsub.f32 %v142, %v1903
    %v1905 = vand.u32 %v1904, 4294901760
    %v1906 = vsub.f32 %v1904, %v1905
    %v1907 = vand.u32 %v1906, 4294901760
    %1908 = vmatpush1.msra.mxu0 %v1907
    %v1909 = vand.u32 %v147, 4294901760
    %v1910 = vsub.f32 %v147, %v1909
    %v1911 = vand.u32 %v1910, 4294901760
    %v1912 = vsub.f32 %v1910, %v1911
    %v1913 = vand.u32 %v1912, 4294901760
    %1914 = vmatprep.subr.mxu0 %v1913
    %v1915 = vand.u32 %v146, 4294901760
    %v1916 = vsub.f32 %v146, %v1915
    %v1917 = vand.u32 %v1916, 4294901760
    %v1918 = vsub.f32 %v1916, %v1917
    %v1919 = vand.u32 %v1918, 4294901760
    %1920 = vmatpush1.msra.mxu0 %v1919
    %v1921 = vand.u32 %v151, 4294901760
    %v1922 = vsub.f32 %v151, %v1921
    %v1923 = vand.u32 %v1922, 4294901760
    %v1924 = vsub.f32 %v1922, %v1923
    %v1925 = vand.u32 %v1924, 4294901760
    %1926 = vmatprep.subr.mxu0 %v1925
    %v1927 = vand.u32 %v150, 4294901760
    %v1928 = vsub.f32 %v150, %v1927
    %v1929 = vand.u32 %v1928, 4294901760
    %v1930 = vsub.f32 %v1928, %v1929
    %v1931 = vand.u32 %v1930, 4294901760
    %1932 = vmatpush1.msra.mxu0 %v1931
    %v1933 = vand.u32 %v155, 4294901760
    %v1934 = vsub.f32 %v155, %v1933
    %v1935 = vand.u32 %v1934, 4294901760
    %v1936 = vsub.f32 %v1934, %v1935
    %v1937 = vand.u32 %v1936, 4294901760
    %1938 = vmatprep.subr.mxu0 %v1937
    %v1939 = vand.u32 %v154, 4294901760
    %v1940 = vsub.f32 %v154, %v1939
    %v1941 = vand.u32 %v1940, 4294901760
    %v1942 = vsub.f32 %v1940, %v1941
    %v1943 = vand.u32 %v1942, 4294901760
    %1944 = vmatpush1.msra.mxu0 %v1943
    %v1945 = vand.u32 %v159, 4294901760
    %v1946 = vsub.f32 %v159, %v1945
    %v1947 = vand.u32 %v1946, 4294901760
    %v1948 = vsub.f32 %v1946, %v1947
    %v1949 = vand.u32 %v1948, 4294901760
    %1950 = vmatprep.subr.mxu0 %v1949
    %v1951 = vand.u32 %v158, 4294901760
    %v1952 = vsub.f32 %v158, %v1951
    %v1953 = vand.u32 %v1952, 4294901760
    %v1954 = vsub.f32 %v1952, %v1953
    %v1955 = vand.u32 %v1954, 4294901760
    %1956 = vmatpush1.msra.mxu0 %v1955
    %v1957 = vand.u32 %v163, 4294901760
    %v1958 = vsub.f32 %v163, %v1957
    %v1959 = vand.u32 %v1958, 4294901760
    %v1960 = vsub.f32 %v1958, %v1959
    %v1961 = vand.u32 %v1960, 4294901760
    %1962 = vmatprep.subr.mxu0 %v1961
    %v1963 = vand.u32 %v162, 4294901760
    %v1964 = vsub.f32 %v162, %v1963
    %v1965 = vand.u32 %v1964, 4294901760
    %v1966 = vsub.f32 %v1964, %v1965
    %v1967 = vand.u32 %v1966, 4294901760
    %1968 = vmatpush1.msra.mxu0 %v1967
    %v1969 = vand.u32 %v167, 4294901760
    %v1970 = vsub.f32 %v167, %v1969
    %v1971 = vand.u32 %v1970, 4294901760
    %v1972 = vsub.f32 %v1970, %v1971
    %v1973 = vand.u32 %v1972, 4294901760
    %1974 = vmatprep.subr.mxu0 %v1973
    %v1975 = vand.u32 %v166, 4294901760
    %v1976 = vsub.f32 %v166, %v1975
    %v1977 = vand.u32 %v1976, 4294901760
    %v1978 = vsub.f32 %v1976, %v1977
    %v1979 = vand.u32 %v1978, 4294901760
    %1980 = vmatpush1.msra.mxu0 %v1979
    %v1981 = vand.u32 %v39, 4294901760
    %1982 = vmatprep.mubr.f32.mxu0 %v1981
    %v1983 = vand.u32 %v38, 4294901760
    %1984 = vmatmul.mubr.f32.gmra.mrb[0].mxu0 %v1983
    %v1985 = vpop.f32.mrb[0].mxu0
    %v1986 = vadd.f32 %v1593, %v1985
    %v1987 = vpop.f32.mrb[0].mxu0
    %v1988 = vadd.f32 %v1595, %v1987
    %1989 = vdwg.mxu0
    %v1990 = vand.u32 %v43, 4294901760
    %v1991 = vsub.f32 %v43, %v1990
    %1992 = vmatprep.subr.mxu0 %v1991
    %v1993 = vand.u32 %v42, 4294901760
    %v1994 = vsub.f32 %v42, %v1993
    %1995 = vmatpush1.msra.mxu0 %v1994
    %v1996 = vand.u32 %v47, 4294901760
    %v1997 = vsub.f32 %v47, %v1996
    %1998 = vmatprep.subr.mxu0 %v1997
    %v1999 = vand.u32 %v46, 4294901760
    %v2000 = vsub.f32 %v46, %v1999
    %2001 = vmatpush1.msra.mxu0 %v2000
    %v2002 = vand.u32 %v51, 4294901760
    %v2003 = vsub.f32 %v51, %v2002
    %2004 = vmatprep.subr.mxu0 %v2003
    %v2005 = vand.u32 %v50, 4294901760
    %v2006 = vsub.f32 %v50, %v2005
    %2007 = vmatpush1.msra.mxu0 %v2006
    %v2008 = vand.u32 %v55, 4294901760
    %v2009 = vsub.f32 %v55, %v2008
    %2010 = vmatprep.subr.mxu0 %v2009
    %v2011 = vand.u32 %v54, 4294901760
    %v2012 = vsub.f32 %v54, %v2011
    %2013 = vmatpush1.msra.mxu0 %v2012
    %v2014 = vand.u32 %v59, 4294901760
    %v2015 = vsub.f32 %v59, %v2014
    %2016 = vmatprep.subr.mxu0 %v2015
    %v2017 = vand.u32 %v58, 4294901760
    %v2018 = vsub.f32 %v58, %v2017
    %2019 = vmatpush1.msra.mxu0 %v2018
    %v2020 = vand.u32 %v63, 4294901760
    %v2021 = vsub.f32 %v63, %v2020
    %2022 = vmatprep.subr.mxu0 %v2021
    %v2023 = vand.u32 %v62, 4294901760
    %v2024 = vsub.f32 %v62, %v2023
    %2025 = vmatpush1.msra.mxu0 %v2024
    %v2026 = vand.u32 %v67, 4294901760
    %v2027 = vsub.f32 %v67, %v2026
    %2028 = vmatprep.subr.mxu0 %v2027
    %v2029 = vand.u32 %v66, 4294901760
    %v2030 = vsub.f32 %v66, %v2029
    %2031 = vmatpush1.msra.mxu0 %v2030
    %v2032 = vand.u32 %v71, 4294901760
    %v2033 = vsub.f32 %v71, %v2032
    %2034 = vmatprep.subr.mxu0 %v2033
    %v2035 = vand.u32 %v70, 4294901760
    %v2036 = vsub.f32 %v70, %v2035
    %2037 = vmatpush1.msra.mxu0 %v2036
    %v2038 = vand.u32 %v75, 4294901760
    %v2039 = vsub.f32 %v75, %v2038
    %2040 = vmatprep.subr.mxu0 %v2039
    %v2041 = vand.u32 %v74, 4294901760
    %v2042 = vsub.f32 %v74, %v2041
    %2043 = vmatpush1.msra.mxu0 %v2042
    %v2044 = vand.u32 %v79, 4294901760
    %v2045 = vsub.f32 %v79, %v2044
    %2046 = vmatprep.subr.mxu0 %v2045
    %v2047 = vand.u32 %v78, 4294901760
    %v2048 = vsub.f32 %v78, %v2047
    %2049 = vmatpush1.msra.mxu0 %v2048
    %v2050 = vand.u32 %v83, 4294901760
    %v2051 = vsub.f32 %v83, %v2050
    %2052 = vmatprep.subr.mxu0 %v2051
    %v2053 = vand.u32 %v82, 4294901760
    %v2054 = vsub.f32 %v82, %v2053
    %2055 = vmatpush1.msra.mxu0 %v2054
    %v2056 = vand.u32 %v87, 4294901760
    %v2057 = vsub.f32 %v87, %v2056
    %2058 = vmatprep.subr.mxu0 %v2057
    %v2059 = vand.u32 %v86, 4294901760
    %v2060 = vsub.f32 %v86, %v2059
    %2061 = vmatpush1.msra.mxu0 %v2060
    %v2062 = vand.u32 %v91, 4294901760
    %v2063 = vsub.f32 %v91, %v2062
    %2064 = vmatprep.subr.mxu0 %v2063
    %v2065 = vand.u32 %v90, 4294901760
    %v2066 = vsub.f32 %v90, %v2065
    %2067 = vmatpush1.msra.mxu0 %v2066
    %v2068 = vand.u32 %v95, 4294901760
    %v2069 = vsub.f32 %v95, %v2068
    %2070 = vmatprep.subr.mxu0 %v2069
    %v2071 = vand.u32 %v94, 4294901760
    %v2072 = vsub.f32 %v94, %v2071
    %2073 = vmatpush1.msra.mxu0 %v2072
    %v2074 = vand.u32 %v99, 4294901760
    %v2075 = vsub.f32 %v99, %v2074
    %2076 = vmatprep.subr.mxu0 %v2075
    %v2077 = vand.u32 %v98, 4294901760
    %v2078 = vsub.f32 %v98, %v2077
    %2079 = vmatpush1.msra.mxu0 %v2078
    %v2080 = vand.u32 %v103, 4294901760
    %v2081 = vsub.f32 %v103, %v2080
    %2082 = vmatprep.subr.mxu0 %v2081
    %v2083 = vand.u32 %v102, 4294901760
    %v2084 = vsub.f32 %v102, %v2083
    %2085 = vmatpush1.msra.mxu0 %v2084
    %v2086 = vand.u32 %v107, 4294901760
    %v2087 = vsub.f32 %v107, %v2086
    %2088 = vmatprep.subr.mxu0 %v2087
    %v2089 = vand.u32 %v106, 4294901760
    %v2090 = vsub.f32 %v106, %v2089
    %2091 = vmatpush1.msra.mxu0 %v2090
    %v2092 = vand.u32 %v111, 4294901760
    %v2093 = vsub.f32 %v111, %v2092
    %2094 = vmatprep.subr.mxu0 %v2093
    %v2095 = vand.u32 %v110, 4294901760
    %v2096 = vsub.f32 %v110, %v2095
    %2097 = vmatpush1.msra.mxu0 %v2096
    %v2098 = vand.u32 %v115, 4294901760
    %v2099 = vsub.f32 %v115, %v2098
    %2100 = vmatprep.subr.mxu0 %v2099
    %v2101 = vand.u32 %v114, 4294901760
    %v2102 = vsub.f32 %v114, %v2101
    %2103 = vmatpush1.msra.mxu0 %v2102
    %v2104 = vand.u32 %v119, 4294901760
    %v2105 = vsub.f32 %v119, %v2104
    %2106 = vmatprep.subr.mxu0 %v2105
    %v2107 = vand.u32 %v118, 4294901760
    %v2108 = vsub.f32 %v118, %v2107
    %2109 = vmatpush1.msra.mxu0 %v2108
    %v2110 = vand.u32 %v123, 4294901760
    %v2111 = vsub.f32 %v123, %v2110
    %2112 = vmatprep.subr.mxu0 %v2111
    %v2113 = vand.u32 %v122, 4294901760
    %v2114 = vsub.f32 %v122, %v2113
    %2115 = vmatpush1.msra.mxu0 %v2114
    %v2116 = vand.u32 %v127, 4294901760
    %v2117 = vsub.f32 %v127, %v2116
    %2118 = vmatprep.subr.mxu0 %v2117
    %v2119 = vand.u32 %v126, 4294901760
    %v2120 = vsub.f32 %v126, %v2119
    %2121 = vmatpush1.msra.mxu0 %v2120
    %v2122 = vand.u32 %v131, 4294901760
    %v2123 = vsub.f32 %v131, %v2122
    %2124 = vmatprep.subr.mxu0 %v2123
    %v2125 = vand.u32 %v130, 4294901760
    %v2126 = vsub.f32 %v130, %v2125
    %2127 = vmatpush1.msra.mxu0 %v2126
    %v2128 = vand.u32 %v135, 4294901760
    %v2129 = vsub.f32 %v135, %v2128
    %2130 = vmatprep.subr.mxu0 %v2129
    %v2131 = vand.u32 %v134, 4294901760
    %v2132 = vsub.f32 %v134, %v2131
    %2133 = vmatpush1.msra.mxu0 %v2132
    %v2134 = vand.u32 %v139, 4294901760
    %v2135 = vsub.f32 %v139, %v2134
    %2136 = vmatprep.subr.mxu0 %v2135
    %v2137 = vand.u32 %v138, 4294901760
    %v2138 = vsub.f32 %v138, %v2137
    %2139 = vmatpush1.msra.mxu0 %v2138
    %v2140 = vand.u32 %v143, 4294901760
    %v2141 = vsub.f32 %v143, %v2140
    %2142 = vmatprep.subr.mxu0 %v2141
    %v2143 = vand.u32 %v142, 4294901760
    %v2144 = vsub.f32 %v142, %v2143
    %2145 = vmatpush1.msra.mxu0 %v2144
    %v2146 = vand.u32 %v147, 4294901760
    %v2147 = vsub.f32 %v147, %v2146
    %2148 = vmatprep.subr.mxu0 %v2147
    %v2149 = vand.u32 %v146, 4294901760
    %v2150 = vsub.f32 %v146, %v2149
    %2151 = vmatpush1.msra.mxu0 %v2150
    %v2152 = vand.u32 %v151, 4294901760
    %v2153 = vsub.f32 %v151, %v2152
    %2154 = vmatprep.subr.mxu0 %v2153
    %v2155 = vand.u32 %v150, 4294901760
    %v2156 = vsub.f32 %v150, %v2155
    %2157 = vmatpush1.msra.mxu0 %v2156
    %v2158 = vand.u32 %v155, 4294901760
    %v2159 = vsub.f32 %v155, %v2158
    %2160 = vmatprep.subr.mxu0 %v2159
    %v2161 = vand.u32 %v154, 4294901760
    %v2162 = vsub.f32 %v154, %v2161
    %2163 = vmatpush1.msra.mxu0 %v2162
    %v2164 = vand.u32 %v159, 4294901760
    %v2165 = vsub.f32 %v159, %v2164
    %2166 = vmatprep.subr.mxu0 %v2165
    %v2167 = vand.u32 %v158, 4294901760
    %v2168 = vsub.f32 %v158, %v2167
    %2169 = vmatpush1.msra.mxu0 %v2168
    %v2170 = vand.u32 %v163, 4294901760
    %v2171 = vsub.f32 %v163, %v2170
    %2172 = vmatprep.subr.mxu0 %v2171
    %v2173 = vand.u32 %v162, 4294901760
    %v2174 = vsub.f32 %v162, %v2173
    %2175 = vmatpush1.msra.mxu0 %v2174
    %v2176 = vand.u32 %v167, 4294901760
    %v2177 = vsub.f32 %v167, %v2176
    %2178 = vmatprep.subr.mxu0 %v2177
    %v2179 = vand.u32 %v166, 4294901760
    %v2180 = vsub.f32 %v166, %v2179
    %2181 = vmatpush1.msra.mxu0 %v2180
    %v2182 = vand.u32 %v39, 4294901760
    %v2183 = vsub.f32 %v39, %v2182
    %2184 = vmatprep.mubr.f32.mxu0 %v2183
    %v2185 = vand.u32 %v38, 4294901760
    %v2186 = vsub.f32 %v38, %v2185
    %2187 = vmatmul.mubr.f32.gmra.mrb[0].mxu0 %v2186
    %v2188 = vpop.f32.mrb[0].mxu0
    %v2189 = vadd.f32 %v1986, %v2188
    %v2190 = vpop.f32.mrb[0].mxu0
    %v2191 = vadd.f32 %v1988, %v2190
    %2192 = vdwg.mxu0
    %v2193 = vand.u32 %v43, 4294901760
    %2194 = vmatprep.subr.mxu0 %v2193
    %v2195 = vand.u32 %v42, 4294901760
    %2196 = vmatpush1.msra.mxu0 %v2195
    %v2197 = vand.u32 %v47, 4294901760
    %2198 = vmatprep.subr.mxu0 %v2197
    %v2199 = vand.u32 %v46, 4294901760
    %2200 = vmatpush1.msra.mxu0 %v2199
    %v2201 = vand.u32 %v51, 4294901760
    %2202 = vmatprep.subr.mxu0 %v2201
    %v2203 = vand.u32 %v50, 4294901760
    %2204 = vmatpush1.msra.mxu0 %v2203
    %v2205 = vand.u32 %v55, 4294901760
    %2206 = vmatprep.subr.mxu0 %v2205
    %v2207 = vand.u32 %v54, 4294901760
    %2208 = vmatpush1.msra.mxu0 %v2207
    %v2209 = vand.u32 %v59, 4294901760
    %2210 = vmatprep.subr.mxu0 %v2209
    %v2211 = vand.u32 %v58, 4294901760
    %2212 = vmatpush1.msra.mxu0 %v2211
    %v2213 = vand.u32 %v63, 4294901760
    %2214 = vmatprep.subr.mxu0 %v2213
    %v2215 = vand.u32 %v62, 4294901760
    %2216 = vmatpush1.msra.mxu0 %v2215
    %v2217 = vand.u32 %v67, 4294901760
    %2218 = vmatprep.subr.mxu0 %v2217
    %v2219 = vand.u32 %v66, 4294901760
    %2220 = vmatpush1.msra.mxu0 %v2219
    %v2221 = vand.u32 %v71, 4294901760
    %2222 = vmatprep.subr.mxu0 %v2221
    %v2223 = vand.u32 %v70, 4294901760
    %2224 = vmatpush1.msra.mxu0 %v2223
    %v2225 = vand.u32 %v75, 4294901760
    %2226 = vmatprep.subr.mxu0 %v2225
    %v2227 = vand.u32 %v74, 4294901760
    %2228 = vmatpush1.msra.mxu0 %v2227
    %v2229 = vand.u32 %v79, 4294901760
    %2230 = vmatprep.subr.mxu0 %v2229
    %v2231 = vand.u32 %v78, 4294901760
    %2232 = vmatpush1.msra.mxu0 %v2231
    %v2233 = vand.u32 %v83, 4294901760
    %2234 = vmatprep.subr.mxu0 %v2233
    %v2235 = vand.u32 %v82, 4294901760
    %2236 = vmatpush1.msra.mxu0 %v2235
    %v2237 = vand.u32 %v87, 4294901760
    %2238 = vmatprep.subr.mxu0 %v2237
    %v2239 = vand.u32 %v86, 4294901760
    %2240 = vmatpush1.msra.mxu0 %v2239
    %v2241 = vand.u32 %v91, 4294901760
    %2242 = vmatprep.subr.mxu0 %v2241
    %v2243 = vand.u32 %v90, 4294901760
    %2244 = vmatpush1.msra.mxu0 %v2243
    %v2245 = vand.u32 %v95, 4294901760
    %2246 = vmatprep.subr.mxu0 %v2245
    %v2247 = vand.u32 %v94, 4294901760
    %2248 = vmatpush1.msra.mxu0 %v2247
    %v2249 = vand.u32 %v99, 4294901760
    %2250 = vmatprep.subr.mxu0 %v2249
    %v2251 = vand.u32 %v98, 4294901760
    %2252 = vmatpush1.msra.mxu0 %v2251
    %v2253 = vand.u32 %v103, 4294901760
    %2254 = vmatprep.subr.mxu0 %v2253
    %v2255 = vand.u32 %v102, 4294901760
    %2256 = vmatpush1.msra.mxu0 %v2255
    %v2257 = vand.u32 %v107, 4294901760
    %2258 = vmatprep.subr.mxu0 %v2257
    %v2259 = vand.u32 %v106, 4294901760
    %2260 = vmatpush1.msra.mxu0 %v2259
    %v2261 = vand.u32 %v111, 4294901760
    %2262 = vmatprep.subr.mxu0 %v2261
    %v2263 = vand.u32 %v110, 4294901760
    %2264 = vmatpush1.msra.mxu0 %v2263
    %v2265 = vand.u32 %v115, 4294901760
    %2266 = vmatprep.subr.mxu0 %v2265
    %v2267 = vand.u32 %v114, 4294901760
    %2268 = vmatpush1.msra.mxu0 %v2267
    %v2269 = vand.u32 %v119, 4294901760
    %2270 = vmatprep.subr.mxu0 %v2269
    %v2271 = vand.u32 %v118, 4294901760
    %2272 = vmatpush1.msra.mxu0 %v2271
    %v2273 = vand.u32 %v123, 4294901760
    %2274 = vmatprep.subr.mxu0 %v2273
    %v2275 = vand.u32 %v122, 4294901760
    %2276 = vmatpush1.msra.mxu0 %v2275
    %v2277 = vand.u32 %v127, 4294901760
    %2278 = vmatprep.subr.mxu0 %v2277
    %v2279 = vand.u32 %v126, 4294901760
    %2280 = vmatpush1.msra.mxu0 %v2279
    %v2281 = vand.u32 %v131, 4294901760
    %2282 = vmatprep.subr.mxu0 %v2281
    %v2283 = vand.u32 %v130, 4294901760
    %2284 = vmatpush1.msra.mxu0 %v2283
    %v2285 = vand.u32 %v135, 4294901760
    %2286 = vmatprep.subr.mxu0 %v2285
    %v2287 = vand.u32 %v134, 4294901760
    %2288 = vmatpush1.msra.mxu0 %v2287
    %v2289 = vand.u32 %v139, 4294901760
    %2290 = vmatprep.subr.mxu0 %v2289
    %v2291 = vand.u32 %v138, 4294901760
    %2292 = vmatpush1.msra.mxu0 %v2291
    %v2293 = vand.u32 %v143, 4294901760
    %2294 = vmatprep.subr.mxu0 %v2293
    %v2295 = vand.u32 %v142, 4294901760
    %2296 = vmatpush1.msra.mxu0 %v2295
    %v2297 = vand.u32 %v147, 4294901760
    %2298 = vmatprep.subr.mxu0 %v2297
    %v2299 = vand.u32 %v146, 4294901760
    %2300 = vmatpush1.msra.mxu0 %v2299
    %v2301 = vand.u32 %v151, 4294901760
    %2302 = vmatprep.subr.mxu0 %v2301
    %v2303 = vand.u32 %v150, 4294901760
    %2304 = vmatpush1.msra.mxu0 %v2303
    %v2305 = vand.u32 %v155, 4294901760
    %2306 = vmatprep.subr.mxu0 %v2305
    %v2307 = vand.u32 %v154, 4294901760
    %2308 = vmatpush1.msra.mxu0 %v2307
    %v2309 = vand.u32 %v159, 4294901760
    %2310 = vmatprep.subr.mxu0 %v2309
    %v2311 = vand.u32 %v158, 4294901760
    %2312 = vmatpush1.msra.mxu0 %v2311
    %v2313 = vand.u32 %v163, 4294901760
    %2314 = vmatprep.subr.mxu0 %v2313
    %v2315 = vand.u32 %v162, 4294901760
    %2316 = vmatpush1.msra.mxu0 %v2315
    %v2317 = vand.u32 %v167, 4294901760
    %2318 = vmatprep.subr.mxu0 %v2317
    %v2319 = vand.u32 %v166, 4294901760
    %2320 = vmatpush1.msra.mxu0 %v2319
    %v2321 = vand.u32 %v39, 4294901760
    %v2322 = vsub.f32 %v39, %v2321
    %v2323 = vand.u32 %v2322, 4294901760
    %2324 = vmatprep.mubr.f32.mxu0 %v2323
    %v2325 = vand.u32 %v38, 4294901760
    %v2326 = vsub.f32 %v38, %v2325
    %v2327 = vand.u32 %v2326, 4294901760
    %2328 = vmatmul.mubr.f32.gmra.mrb[0].mxu0 %v2327
    %v2329 = vpop.f32.mrb[0].mxu0
    %v2330 = vadd.f32 %v2189, %v2329
    %v2331 = vpop.f32.mrb[0].mxu0
    %v2332 = vadd.f32 %v2191, %v2331
    %2333 = vdwg.mxu0
    %v2334 = vand.u32 %v43, 4294901760
    %v2335 = vsub.f32 %v43, %v2334
    %v2336 = vand.u32 %v2335, 4294901760
    %2337 = vmatprep.subr.mxu0 %v2336
    %v2338 = vand.u32 %v42, 4294901760
    %v2339 = vsub.f32 %v42, %v2338
    %v2340 = vand.u32 %v2339, 4294901760
    %2341 = vmatpush1.msra.mxu0 %v2340
    %v2342 = vand.u32 %v47, 4294901760
    %v2343 = vsub.f32 %v47, %v2342
    %v2344 = vand.u32 %v2343, 4294901760
    %2345 = vmatprep.subr.mxu0 %v2344
    %v2346 = vand.u32 %v46, 4294901760
    %v2347 = vsub.f32 %v46, %v2346
    %v2348 = vand.u32 %v2347, 4294901760
    %2349 = vmatpush1.msra.mxu0 %v2348
    %v2350 = vand.u32 %v51, 4294901760
    %v2351 = vsub.f32 %v51, %v2350
    %v2352 = vand.u32 %v2351, 4294901760
    %2353 = vmatprep.subr.mxu0 %v2352
    %v2354 = vand.u32 %v50, 4294901760
    %v2355 = vsub.f32 %v50, %v2354
    %v2356 = vand.u32 %v2355, 4294901760
    %2357 = vmatpush1.msra.mxu0 %v2356
    %v2358 = vand.u32 %v55, 4294901760
    %v2359 = vsub.f32 %v55, %v2358
    %v2360 = vand.u32 %v2359, 4294901760
    %2361 = vmatprep.subr.mxu0 %v2360
    %v2362 = vand.u32 %v54, 4294901760
    %v2363 = vsub.f32 %v54, %v2362
    %v2364 = vand.u32 %v2363, 4294901760
    %2365 = vmatpush1.msra.mxu0 %v2364
    %v2366 = vand.u32 %v59, 4294901760
    %v2367 = vsub.f32 %v59, %v2366
    %v2368 = vand.u32 %v2367, 4294901760
    %2369 = vmatprep.subr.mxu0 %v2368
    %v2370 = vand.u32 %v58, 4294901760
    %v2371 = vsub.f32 %v58, %v2370
    %v2372 = vand.u32 %v2371, 4294901760
    %2373 = vmatpush1.msra.mxu0 %v2372
    %v2374 = vand.u32 %v63, 4294901760
    %v2375 = vsub.f32 %v63, %v2374
    %v2376 = vand.u32 %v2375, 4294901760
    %2377 = vmatprep.subr.mxu0 %v2376
    %v2378 = vand.u32 %v62, 4294901760
    %v2379 = vsub.f32 %v62, %v2378
    %v2380 = vand.u32 %v2379, 4294901760
    %2381 = vmatpush1.msra.mxu0 %v2380
    %v2382 = vand.u32 %v67, 4294901760
    %v2383 = vsub.f32 %v67, %v2382
    %v2384 = vand.u32 %v2383, 4294901760
    %2385 = vmatprep.subr.mxu0 %v2384
    %v2386 = vand.u32 %v66, 4294901760
    %v2387 = vsub.f32 %v66, %v2386
    %v2388 = vand.u32 %v2387, 4294901760
    %2389 = vmatpush1.msra.mxu0 %v2388
    %v2390 = vand.u32 %v71, 4294901760
    %v2391 = vsub.f32 %v71, %v2390
    %v2392 = vand.u32 %v2391, 4294901760
    %2393 = vmatprep.subr.mxu0 %v2392
    %v2394 = vand.u32 %v70, 4294901760
    %v2395 = vsub.f32 %v70, %v2394
    %v2396 = vand.u32 %v2395, 4294901760
    %2397 = vmatpush1.msra.mxu0 %v2396
    %v2398 = vand.u32 %v75, 4294901760
    %v2399 = vsub.f32 %v75, %v2398
    %v2400 = vand.u32 %v2399, 4294901760
    %2401 = vmatprep.subr.mxu0 %v2400
    %v2402 = vand.u32 %v74, 4294901760
    %v2403 = vsub.f32 %v74, %v2402
    %v2404 = vand.u32 %v2403, 4294901760
    %2405 = vmatpush1.msra.mxu0 %v2404
    %v2406 = vand.u32 %v79, 4294901760
    %v2407 = vsub.f32 %v79, %v2406
    %v2408 = vand.u32 %v2407, 4294901760
    %2409 = vmatprep.subr.mxu0 %v2408
    %v2410 = vand.u32 %v78, 4294901760
    %v2411 = vsub.f32 %v78, %v2410
    %v2412 = vand.u32 %v2411, 4294901760
    %2413 = vmatpush1.msra.mxu0 %v2412
    %v2414 = vand.u32 %v83, 4294901760
    %v2415 = vsub.f32 %v83, %v2414
    %v2416 = vand.u32 %v2415, 4294901760
    %2417 = vmatprep.subr.mxu0 %v2416
    %v2418 = vand.u32 %v82, 4294901760
    %v2419 = vsub.f32 %v82, %v2418
    %v2420 = vand.u32 %v2419, 4294901760
    %2421 = vmatpush1.msra.mxu0 %v2420
    %v2422 = vand.u32 %v87, 4294901760
    %v2423 = vsub.f32 %v87, %v2422
    %v2424 = vand.u32 %v2423, 4294901760
    %2425 = vmatprep.subr.mxu0 %v2424
    %v2426 = vand.u32 %v86, 4294901760
    %v2427 = vsub.f32 %v86, %v2426
    %v2428 = vand.u32 %v2427, 4294901760
    %2429 = vmatpush1.msra.mxu0 %v2428
    %v2430 = vand.u32 %v91, 4294901760
    %v2431 = vsub.f32 %v91, %v2430
    %v2432 = vand.u32 %v2431, 4294901760
    %2433 = vmatprep.subr.mxu0 %v2432
    %v2434 = vand.u32 %v90, 4294901760
    %v2435 = vsub.f32 %v90, %v2434
    %v2436 = vand.u32 %v2435, 4294901760
    %2437 = vmatpush1.msra.mxu0 %v2436
    %v2438 = vand.u32 %v95, 4294901760
    %v2439 = vsub.f32 %v95, %v2438
    %v2440 = vand.u32 %v2439, 4294901760
    %2441 = vmatprep.subr.mxu0 %v2440
    %v2442 = vand.u32 %v94, 4294901760
    %v2443 = vsub.f32 %v94, %v2442
    %v2444 = vand.u32 %v2443, 4294901760
    %2445 = vmatpush1.msra.mxu0 %v2444
    %v2446 = vand.u32 %v99, 4294901760
    %v2447 = vsub.f32 %v99, %v2446
    %v2448 = vand.u32 %v2447, 4294901760
    %2449 = vmatprep.subr.mxu0 %v2448
    %v2450 = vand.u32 %v98, 4294901760
    %v2451 = vsub.f32 %v98, %v2450
    %v2452 = vand.u32 %v2451, 4294901760
    %2453 = vmatpush1.msra.mxu0 %v2452
    %v2454 = vand.u32 %v103, 4294901760
    %v2455 = vsub.f32 %v103, %v2454
    %v2456 = vand.u32 %v2455, 4294901760
    %2457 = vmatprep.subr.mxu0 %v2456
    %v2458 = vand.u32 %v102, 4294901760
    %v2459 = vsub.f32 %v102, %v2458
    %v2460 = vand.u32 %v2459, 4294901760
    %2461 = vmatpush1.msra.mxu0 %v2460
    %v2462 = vand.u32 %v107, 4294901760
    %v2463 = vsub.f32 %v107, %v2462
    %v2464 = vand.u32 %v2463, 4294901760
    %2465 = vmatprep.subr.mxu0 %v2464
    %v2466 = vand.u32 %v106, 4294901760
    %v2467 = vsub.f32 %v106, %v2466
    %v2468 = vand.u32 %v2467, 4294901760
    %2469 = vmatpush1.msra.mxu0 %v2468
    %v2470 = vand.u32 %v111, 4294901760
    %v2471 = vsub.f32 %v111, %v2470
    %v2472 = vand.u32 %v2471, 4294901760
    %2473 = vmatprep.subr.mxu0 %v2472
    %v2474 = vand.u32 %v110, 4294901760
    %v2475 = vsub.f32 %v110, %v2474
    %v2476 = vand.u32 %v2475, 4294901760
    %2477 = vmatpush1.msra.mxu0 %v2476
    %v2478 = vand.u32 %v115, 4294901760
    %v2479 = vsub.f32 %v115, %v2478
    %v2480 = vand.u32 %v2479, 4294901760
    %2481 = vmatprep.subr.mxu0 %v2480
    %v2482 = vand.u32 %v114, 4294901760
    %v2483 = vsub.f32 %v114, %v2482
    %v2484 = vand.u32 %v2483, 4294901760
    %2485 = vmatpush1.msra.mxu0 %v2484
    %v2486 = vand.u32 %v119, 4294901760
    %v2487 = vsub.f32 %v119, %v2486
    %v2488 = vand.u32 %v2487, 4294901760
    %2489 = vmatprep.subr.mxu0 %v2488
    %v2490 = vand.u32 %v118, 4294901760
    %v2491 = vsub.f32 %v118, %v2490
    %v2492 = vand.u32 %v2491, 4294901760
    %2493 = vmatpush1.msra.mxu0 %v2492
    %v2494 = vand.u32 %v123, 4294901760
    %v2495 = vsub.f32 %v123, %v2494
    %v2496 = vand.u32 %v2495, 4294901760
    %2497 = vmatprep.subr.mxu0 %v2496
    %v2498 = vand.u32 %v122, 4294901760
    %v2499 = vsub.f32 %v122, %v2498
    %v2500 = vand.u32 %v2499, 4294901760
    %2501 = vmatpush1.msra.mxu0 %v2500
    %v2502 = vand.u32 %v127, 4294901760
    %v2503 = vsub.f32 %v127, %v2502
    %v2504 = vand.u32 %v2503, 4294901760
    %2505 = vmatprep.subr.mxu0 %v2504
    %v2506 = vand.u32 %v126, 4294901760
    %v2507 = vsub.f32 %v126, %v2506
    %v2508 = vand.u32 %v2507, 4294901760
    %2509 = vmatpush1.msra.mxu0 %v2508
    %v2510 = vand.u32 %v131, 4294901760
    %v2511 = vsub.f32 %v131, %v2510
    %v2512 = vand.u32 %v2511, 4294901760
    %2513 = vmatprep.subr.mxu0 %v2512
    %v2514 = vand.u32 %v130, 4294901760
    %v2515 = vsub.f32 %v130, %v2514
    %v2516 = vand.u32 %v2515, 4294901760
    %2517 = vmatpush1.msra.mxu0 %v2516
    %v2518 = vand.u32 %v135, 4294901760
    %v2519 = vsub.f32 %v135, %v2518
    %v2520 = vand.u32 %v2519, 4294901760
    %2521 = vmatprep.subr.mxu0 %v2520
    %v2522 = vand.u32 %v134, 4294901760
    %v2523 = vsub.f32 %v134, %v2522
    %v2524 = vand.u32 %v2523, 4294901760
    %2525 = vmatpush1.msra.mxu0 %v2524
    %v2526 = vand.u32 %v139, 4294901760
    %v2527 = vsub.f32 %v139, %v2526
    %v2528 = vand.u32 %v2527, 4294901760
    %2529 = vmatprep.subr.mxu0 %v2528
    %v2530 = vand.u32 %v138, 4294901760
    %v2531 = vsub.f32 %v138, %v2530
    %v2532 = vand.u32 %v2531, 4294901760
    %2533 = vmatpush1.msra.mxu0 %v2532
    %v2534 = vand.u32 %v143, 4294901760
    %v2535 = vsub.f32 %v143, %v2534
    %v2536 = vand.u32 %v2535, 4294901760
    %2537 = vmatprep.subr.mxu0 %v2536
    %v2538 = vand.u32 %v142, 4294901760
    %v2539 = vsub.f32 %v142, %v2538
    %v2540 = vand.u32 %v2539, 4294901760
    %2541 = vmatpush1.msra.mxu0 %v2540
    %v2542 = vand.u32 %v147, 4294901760
    %v2543 = vsub.f32 %v147, %v2542
    %v2544 = vand.u32 %v2543, 4294901760
    %2545 = vmatprep.subr.mxu0 %v2544
    %v2546 = vand.u32 %v146, 4294901760
    %v2547 = vsub.f32 %v146, %v2546
    %v2548 = vand.u32 %v2547, 4294901760
    %2549 = vmatpush1.msra.mxu0 %v2548
    %v2550 = vand.u32 %v151, 4294901760
    %v2551 = vsub.f32 %v151, %v2550
    %v2552 = vand.u32 %v2551, 4294901760
    %2553 = vmatprep.subr.mxu0 %v2552
    %v2554 = vand.u32 %v150, 4294901760
    %v2555 = vsub.f32 %v150, %v2554
    %v2556 = vand.u32 %v2555, 4294901760
    %2557 = vmatpush1.msra.mxu0 %v2556
    %v2558 = vand.u32 %v155, 4294901760
    %v2559 = vsub.f32 %v155, %v2558
    %v2560 = vand.u32 %v2559, 4294901760
    %2561 = vmatprep.subr.mxu0 %v2560
    %v2562 = vand.u32 %v154, 4294901760
    %v2563 = vsub.f32 %v154, %v2562
    %v2564 = vand.u32 %v2563, 4294901760
    %2565 = vmatpush1.msra.mxu0 %v2564
    %v2566 = vand.u32 %v159, 4294901760
    %v2567 = vsub.f32 %v159, %v2566
    %v2568 = vand.u32 %v2567, 4294901760
    %2569 = vmatprep.subr.mxu0 %v2568
    %v2570 = vand.u32 %v158, 4294901760
    %v2571 = vsub.f32 %v158, %v2570
    %v2572 = vand.u32 %v2571, 4294901760
    %2573 = vmatpush1.msra.mxu0 %v2572
    %v2574 = vand.u32 %v163, 4294901760
    %v2575 = vsub.f32 %v163, %v2574
    %v2576 = vand.u32 %v2575, 4294901760
    %2577 = vmatprep.subr.mxu0 %v2576
    %v2578 = vand.u32 %v162, 4294901760
    %v2579 = vsub.f32 %v162, %v2578
    %v2580 = vand.u32 %v2579, 4294901760
    %2581 = vmatpush1.msra.mxu0 %v2580
    %v2582 = vand.u32 %v167, 4294901760
    %v2583 = vsub.f32 %v167, %v2582
    %v2584 = vand.u32 %v2583, 4294901760
    %2585 = vmatprep.subr.mxu0 %v2584
    %v2586 = vand.u32 %v166, 4294901760
    %v2587 = vsub.f32 %v166, %v2586
    %v2588 = vand.u32 %v2587, 4294901760
    %2589 = vmatpush1.msra.mxu0 %v2588
    %v2590 = vand.u32 %v39, 4294901760
    %2591 = vmatprep.mubr.f32.mxu0 %v2590
    %v2592 = vand.u32 %v38, 4294901760
    %2593 = vmatmul.mubr.f32.gmra.mrb[0].mxu0 %v2592
    %v2594 = vpop.f32.mrb[0].mxu0
    %v2595 = vadd.f32 %v2330, %v2594
    %v2596 = vpop.f32.mrb[0].mxu0
    %v2597 = vadd.f32 %v2332, %v2596
    %2598 = vdwg.mxu0
    %v2599 = vand.u32 %v43, 4294901760
    %2600 = vmatprep.subr.mxu0 %v2599
    %v2601 = vand.u32 %v42, 4294901760
    %2602 = vmatpush1.msra.mxu0 %v2601
    %v2603 = vand.u32 %v47, 4294901760
    %2604 = vmatprep.subr.mxu0 %v2603
    %v2605 = vand.u32 %v46, 4294901760
    %2606 = vmatpush1.msra.mxu0 %v2605
    %v2607 = vand.u32 %v51, 4294901760
    %2608 = vmatprep.subr.mxu0 %v2607
    %v2609 = vand.u32 %v50, 4294901760
    %2610 = vmatpush1.msra.mxu0 %v2609
    %v2611 = vand.u32 %v55, 4294901760
    %2612 = vmatprep.subr.mxu0 %v2611
    %v2613 = vand.u32 %v54, 4294901760
    %2614 = vmatpush1.msra.mxu0 %v2613
    %v2615 = vand.u32 %v59, 4294901760
    %2616 = vmatprep.subr.mxu0 %v2615
    %v2617 = vand.u32 %v58, 4294901760
    %2618 = vmatpush1.msra.mxu0 %v2617
    %v2619 = vand.u32 %v63, 4294901760
    %2620 = vmatprep.subr.mxu0 %v2619
    %v2621 = vand.u32 %v62, 4294901760
    %2622 = vmatpush1.msra.mxu0 %v2621
    %v2623 = vand.u32 %v67, 4294901760
    %2624 = vmatprep.subr.mxu0 %v2623
    %v2625 = vand.u32 %v66, 4294901760
    %2626 = vmatpush1.msra.mxu0 %v2625
    %v2627 = vand.u32 %v71, 4294901760
    %2628 = vmatprep.subr.mxu0 %v2627
    %v2629 = vand.u32 %v70, 4294901760
    %2630 = vmatpush1.msra.mxu0 %v2629
    %v2631 = vand.u32 %v75, 4294901760
    %2632 = vmatprep.subr.mxu0 %v2631
    %v2633 = vand.u32 %v74, 4294901760
    %2634 = vmatpush1.msra.mxu0 %v2633
    %v2635 = vand.u32 %v79, 4294901760
    %2636 = vmatprep.subr.mxu0 %v2635
    %v2637 = vand.u32 %v78, 4294901760
    %2638 = vmatpush1.msra.mxu0 %v2637
    %v2639 = vand.u32 %v83, 4294901760
    %2640 = vmatprep.subr.mxu0 %v2639
    %v2641 = vand.u32 %v82, 4294901760
    %2642 = vmatpush1.msra.mxu0 %v2641
    %v2643 = vand.u32 %v87, 4294901760
    %2644 = vmatprep.subr.mxu0 %v2643
    %v2645 = vand.u32 %v86, 4294901760
    %2646 = vmatpush1.msra.mxu0 %v2645
    %v2647 = vand.u32 %v91, 4294901760
    %2648 = vmatprep.subr.mxu0 %v2647
    %v2649 = vand.u32 %v90, 4294901760
    %2650 = vmatpush1.msra.mxu0 %v2649
    %v2651 = vand.u32 %v95, 4294901760
    %2652 = vmatprep.subr.mxu0 %v2651
    %v2653 = vand.u32 %v94, 4294901760
    %2654 = vmatpush1.msra.mxu0 %v2653
    %v2655 = vand.u32 %v99, 4294901760
    %2656 = vmatprep.subr.mxu0 %v2655
    %v2657 = vand.u32 %v98, 4294901760
    %2658 = vmatpush1.msra.mxu0 %v2657
    %v2659 = vand.u32 %v103, 4294901760
    %2660 = vmatprep.subr.mxu0 %v2659
    %v2661 = vand.u32 %v102, 4294901760
    %2662 = vmatpush1.msra.mxu0 %v2661
    %v2663 = vand.u32 %v107, 4294901760
    %2664 = vmatprep.subr.mxu0 %v2663
    %v2665 = vand.u32 %v106, 4294901760
    %2666 = vmatpush1.msra.mxu0 %v2665
    %v2667 = vand.u32 %v111, 4294901760
    %2668 = vmatprep.subr.mxu0 %v2667
    %v2669 = vand.u32 %v110, 4294901760
    %2670 = vmatpush1.msra.mxu0 %v2669
    %v2671 = vand.u32 %v115, 4294901760
    %2672 = vmatprep.subr.mxu0 %v2671
    %v2673 = vand.u32 %v114, 4294901760
    %2674 = vmatpush1.msra.mxu0 %v2673
    %v2675 = vand.u32 %v119, 4294901760
    %2676 = vmatprep.subr.mxu0 %v2675
    %v2677 = vand.u32 %v118, 4294901760
    %2678 = vmatpush1.msra.mxu0 %v2677
    %v2679 = vand.u32 %v123, 4294901760
    %2680 = vmatprep.subr.mxu0 %v2679
    %v2681 = vand.u32 %v122, 4294901760
    %2682 = vmatpush1.msra.mxu0 %v2681
    %v2683 = vand.u32 %v127, 4294901760
    %2684 = vmatprep.subr.mxu0 %v2683
    %v2685 = vand.u32 %v126, 4294901760
    %2686 = vmatpush1.msra.mxu0 %v2685
    %v2687 = vand.u32 %v131, 4294901760
    %2688 = vmatprep.subr.mxu0 %v2687
    %v2689 = vand.u32 %v130, 4294901760
    %2690 = vmatpush1.msra.mxu0 %v2689
    %v2691 = vand.u32 %v135, 4294901760
    %2692 = vmatprep.subr.mxu0 %v2691
    %v2693 = vand.u32 %v134, 4294901760
    %2694 = vmatpush1.msra.mxu0 %v2693
    %v2695 = vand.u32 %v139, 4294901760
    %2696 = vmatprep.subr.mxu0 %v2695
    %v2697 = vand.u32 %v138, 4294901760
    %2698 = vmatpush1.msra.mxu0 %v2697
    %v2699 = vand.u32 %v143, 4294901760
    %2700 = vmatprep.subr.mxu0 %v2699
    %v2701 = vand.u32 %v142, 4294901760
    %2702 = vmatpush1.msra.mxu0 %v2701
    %v2703 = vand.u32 %v147, 4294901760
    %2704 = vmatprep.subr.mxu0 %v2703
    %v2705 = vand.u32 %v146, 4294901760
    %2706 = vmatpush1.msra.mxu0 %v2705
    %v2707 = vand.u32 %v151, 4294901760
    %2708 = vmatprep.subr.mxu0 %v2707
    %v2709 = vand.u32 %v150, 4294901760
    %2710 = vmatpush1.msra.mxu0 %v2709
    %v2711 = vand.u32 %v155, 4294901760
    %2712 = vmatprep.subr.mxu0 %v2711
    %v2713 = vand.u32 %v154, 4294901760
    %2714 = vmatpush1.msra.mxu0 %v2713
    %v2715 = vand.u32 %v159, 4294901760
    %2716 = vmatprep.subr.mxu0 %v2715
    %v2717 = vand.u32 %v158, 4294901760
    %2718 = vmatpush1.msra.mxu0 %v2717
    %v2719 = vand.u32 %v163, 4294901760
    %2720 = vmatprep.subr.mxu0 %v2719
    %v2721 = vand.u32 %v162, 4294901760
    %2722 = vmatpush1.msra.mxu0 %v2721
    %v2723 = vand.u32 %v167, 4294901760
    %2724 = vmatprep.subr.mxu0 %v2723
    %v2725 = vand.u32 %v166, 4294901760
    %2726 = vmatpush1.msra.mxu0 %v2725
    %v2727 = vand.u32 %v39, 4294901760
    %2728 = vmatprep.mubr.f32.mxu0 %v2727
    %v2729 = vand.u32 %v38, 4294901760
    %2730 = vmatmul.mubr.f32.gmra.mrb[0].mxu0 %v2729
    %v2731 = vpop.f32.mrb[0].mxu0
    %v2732 = vadd.f32 %v2595, %v2731
    %v2733 = vpop.f32.mrb[0].mxu0
    %v2734 = vadd.f32 %v2597, %v2733
    %2735 = vdwg.mxu0
    %v2736 = vxor.u32 %v1448, 2147483648
    %v2737 = vmul.f32 %v2736, 1.442695
    %v2738 = vpow.pop %v2737
    %v2739 = vadd.f32 %v2738, 1.0
    %v2740 = vrcp.pop %v2739
    %v2741 = vmul.f32 1.0, %v2740
    %v2742 = vxor.u32 %v1450, 2147483648
    %v2743 = vmul.f32 %v2742, 1.442695
    %v2744 = vpow.pop %v2743
    %v2745 = vadd.f32 %v2744, 1.0
    %v2746 = vrcp.pop %v2745
    %v2747 = vmul.f32 1.0, %v2746
    %v2748 = vmul.f32 %v2741, %v2734
    %v2749 = vadd.f32 %v2732, %v2748
    %v2750 = vtanh.pop %v2749
    %v2751 = vsub.f32 1.0, %v2747
    %v2752 = vmul.f32 %v2751, %v2750
    %v2753 = vmul.f32 %v2747, %v39
    %v2754 = vadd.f32 %v2752, %v2753
    %2755 = vst [vmem:[#allocation7] sm:$0xff] %v2754
    // Predicated region
    $region18: #{tpu_custom_call.1} parent=1 // pred_check
      _
    $region19: #{tpu_custom_call.1} parent=1 // pred_check_branch
      %2757 = sbr.rel (0) target = $region21
    $region20: #{tpu_custom_call.1} parent=1 // pred_region
      %s2759 = ssub.s32 128, 128
      %2760 = vsyncadd [#allocation4], %s2759
      %s2762 = sshll.u32 [#allocation7], 4
      %s2763 = int_to_ptr.vmem [resolvable:$true] %s2762
      %2765 = dma.vmem_to_hbm [thread:$0]  %s2763, 128, %s2, [#allocation4]
    $region21: #{tpu_custom_call.1} parent=1 // pred_fallthru
      _
    // Predicated region
    $region22: #{tpu_custom_call.1} parent=1 // pred_check
      _
    $region23: #{tpu_custom_call.1} parent=1 // pred_check_branch
      %2767 = sbr.rel (0) target = $region25
    $region24: #{tpu_custom_call.1} parent=1 // pred_region
      %2768 = dma.done [#allocation4], 128
    $region25: #{tpu_custom_call.1} parent=1 // pred_fallthru
      _
    %2769 = vsyncpa [#allocation3], 1
    %2770 = vsyncpa [#allocation6], 1
    %2771 = vsyncpa [#allocation4], 1

</llo_original>
